<compile_context>
chip_gen: v6e
topology: v6e:2x2x1
jax: 0.10.0
libtpu: 0.0.40
codegen_flags: <defaults>
</compile_context>

<pallas_src>
import math
import functools
import numpy as np
import jax
import jax.numpy as jnp
from jax import lax
from jax.experimental import pallas as pl
from jax.experimental.pallas import tpu as pltpu


def _dot(a, b):
    return jnp.dot(a, b, preferred_element_type=jnp.float32)


def _rowsum(x):
    # reduce over sublanes (features), keep the lane (batch) axis -> (1, lanes)
    return jnp.sum(x, axis=0, keepdims=True)


def _round8(n):
    return -(-n // 8) * 8


def _pick_lane_tile(bs):
    """Generation-matched batch-lane tile (see header notes)."""
    try:
        kind = jax.devices()[0].device_kind.lower()
    except Exception:
        kind = ""
    old_gen = any(v in kind for v in ("v2", "v3", "v4", "v5"))
    tile = 128 if old_gen else 256          # v6e/v7x MXU is 2x256x256 -> 256-wide pushes
    if ("7" in kind) and tile == 256:
        # v7x has 2 TensorCores per chip - keep the grid count even when possible so
        # dimension_semantics=("parallel",) actually uses both cores.
        if pl.cdiv(bs, 256) % 2 == 1 and pl.cdiv(bs, 128) % 2 == 0:
            tile = 128
    return tile


def _make_kernel(D, tile, offsets):
    """offsets = [x0_row_off, eps_1_row_off, ..., eps_T_row_off]; static, 8-aligned."""
    T = len(D) - 3
    nG = T - 1

    def kernel(coef_ref, misc_ref, stream_ref, *refs):
        p = 0
        A_refs = refs[p:p + T]; p += T
        B_refs = refs[p:p + T]; p += T
        G_refs = refs[p:p + nG]; p += nG            # G_t = B_t @ B_t^T, t = 1..T-1
        Az_ref = refs[p]; p += 1
        Bz_ref = refs[p]; p += 1
        AzAz_ref = refs[p]; p += 1                  # Az * Az (weight-only, precomputed)
        lane_loss_ref = refs[p]; p += 1             # (1, tile)   per-lane partial loss
        eta_ref = refs[p]                           # (D[-2], tile)

        # Static-offset slices of the single streamed (rows, tile) input.
        x0 = stream_ref[offsets[0]:offsets[0] + D[0], :]        # (D0, tile)

        # ---------------- layer 0: diffusion step + reconstruction loss -------
        eps0 = stream_ref[offsets[1]:offsets[1] + D[1], :]
        Bx0 = _dot(B_refs[0][...], x0)                          # bar_B_0 @ x0
        xt = coef_ref[0, 0] * Bx0 + coef_ref[0, 1] * eps0
        mu = jnp.maximum(_dot(A_refs[0][...], xt), 0.0)
        acc = misc_ref[0] * _rowsum((x0 - mu) ** 2)             # (1, tile)

        # ---------------- layers 1..T-1: layer-matching losses (via G_t) -------
        for tt in range(1, T):
            eps_t = stream_ref[offsets[tt + 1]:offsets[tt + 1] + D[tt + 1], :]
            B_tt = B_refs[tt][...]
            Bx0_prev = Bx0                                      # bar_B_{t-1} @ x0
            # One wide MXU push for the two same-weight matmuls of this layer.
            fused = _dot(B_tt, jnp.concatenate([Bx0, xt], axis=1))   # (D[tt+1], 2*tile)
            Bx0 = fused[:, :tile]
            xt = coef_ref[tt, 0] * fused[:, tile:] + coef_ref[tt, 1] * eps_t
            xhat = jnp.maximum(_dot(A_refs[tt][...], xt), 0.0)
            y = xhat - Bx0_prev
            By = _dot(B_tt, y)
            GBy = _dot(G_refs[tt - 1][...], By)
            # 0.5/bs and all scalar coefficients are pre-folded into coef[tt, 2:6]
            acc = acc + (coef_ref[tt, 2] * _rowsum(y * y)
                         + coef_ref[tt, 3] * _rowsum(By * By)
                         + coef_ref[tt, 4] * _rowsum(By * GBy)
                         + coef_ref[tt, 5] * _rowsum(GBy * GBy))

        # ---------------- terminal (Dirichlet) layer ---------------------------
        eta = jnp.exp(_dot(Bz_ref[...], xt))                    # (D[-2], tile)
        eta_ref[...] = eta
        tilde = _rowsum(eta)                                    # (1, tile)
        eta_bar = eta * pl.reciprocal(tilde, approx=True)
        W = eta_bar * pl.reciprocal(1.0 + tilde, approx=True)
        # Fused same-weight push: Az @ [eta_bar | W]  -> (D[-3], 2*tile)
        fused_z = _dot(Az_ref[...], jnp.concatenate([eta_bar, W], axis=1))
        Az_eta = fused_z[:, :tile]
        AzW = fused_z[:, tile:]
        ls_p = _rowsum((xt - Az_eta) ** 2)
        # trace(Az diag(sum_b W) Az^T) -> per-lane: sum_i [(Az*Az) @ W]_ib
        term1 = _rowsum(_dot(AzAz_ref[...], W))
        # trace(Az W eta_bar^T Az^T)   -> per-lane: sum_i (Az@W)_ib * (Az@eta_bar)_ib
        term2 = _rowsum(AzW * Az_eta)
        acc = acc + misc_ref[1] * (ls_p + term1 - term2)

        # Padded batch lanes are NOT masked here; the wrapper slices [:, :bs].
        lane_loss_ref[...] = acc

    return kernel


def diffusion_dim_reduction_forward(params, x, eps_list, D):
    """Returns (loss, ort_pen), each shape (1,), matching the PyTorch module."""
    T = len(D) - 3
    bs = x.shape[0]
    x0 = x.reshape(bs, -1).T.astype(jnp.float32)                 # (D0, bs) feature-major
    assert x0.shape[0] == D[0]

    # ---- lane-dense batch padding / tiling (generation-matched tile) ----------
    tile = _pick_lane_tile(bs)
    ntiles = pl.cdiv(bs, tile)
    bs_pad = ntiles * tile
    pad = bs_pad - bs

    # ---- single streamed input: [x0 ; eps_1 ; ... ; eps_T] along sublanes -----
    segs = [x0] + [e.astype(jnp.float32) for e in eps_list]
    offsets, blocks, cur = [], [], 0
    for s in segs:
        offsets.append(cur)
        rows = s.shape[0]
        rows8 = _round8(rows)                                    # keep offsets 8-aligned
        blocks.append(jnp.pad(s, ((0, rows8 - rows), (0, pad))))
        cur += rows8
    stream = jnp.concatenate(blocks, axis=0)                     # (cur, bs_pad)

    # ---- scalar parameter transforms (fed via SMEM) ---------------------------
    a_sig = jax.nn.sigmoid(params['a'])                          # (T,)
    a_acc = jnp.cumprod(a_sig)                                   # bar_alpha_t
    sig2 = jnp.exp(params['sigma'][0])
    coef = jnp.zeros((T, 6), jnp.float32)
    coef = coef.at[:, 0].set(jnp.sqrt(a_sig))
    coef = coef.at[:, 1].set(jnp.sqrt(1.0 - a_sig))
    if T > 1:
        bar_prev = a_acc[:-1]                                    # bar_alpha_{t-1}
        a_now = a_acc[1:]
        a_t = a_sig[1:]
        temp_a = (1.0 - bar_prev) / (1.0 - a_now)
        c2 = jnp.sqrt(bar_prev)
        c3 = c2 * a_t * temp_a
        c4 = 1.0 / (1.0 - bar_prev)
        c5 = a_t / (1.0 - a_t)
        half = 0.5 / bs
        # temp = c4*sum(diff^2) + c5*sum((B diff)^2), expanded in |y|^2, |By|^2,
        # (By.GBy), |GBy|^2 with G = B B^T  (0.5/bs folded in).
        coef = coef.at[1:, 2].set(half * c4 * c2 * c2)
        coef = coef.at[1:, 3].set(half * (c5 * c2 * c2 - 2.0 * c4 * c2 * c3))
        coef = coef.at[1:, 4].set(half * (c4 * c3 * c3 - 2.0 * c5 * c2 * c3))
        coef = coef.at[1:, 5].set(half * c5 * c3 * c3)
    misc = jnp.stack([0.5 / (bs * sig2),
                      0.5 / ((1.0 - a_acc[-1] + 1e-12) * bs)]).astype(jnp.float32)

    # ---- weight-only precompute (wrapper): G_t = B_t B_t^T, Az*Az -------------
    # Reused by the kernel's layer-matching math AND by the (batch-independent)
    # orthogonality penalty, which is hoisted out of the kernel.
    mmh = functools.partial(jnp.matmul, precision=lax.Precision.HIGHEST)
    G = [mmh(params['B'][t], params['B'][t].T) for t in range(T)]
    ort = jnp.zeros((), jnp.float32)
    for t in range(T):
        n = G[t].shape[0]
        ort = ort + jnp.sum((G[t] - jnp.eye(n, dtype=jnp.float32)) ** 2)
    AzAz = params['Az'] * params['Az']                           # hoisted from the kernel

    kernel = _make_kernel(D, tile, offsets)

    smem_spec = pl.BlockSpec(memory_space=pltpu.MemorySpace.SMEM)

    def full_spec(arr):   # whole (small) weight matrix resident for every batch tile
        return pl.BlockSpec(arr.shape, lambda i: (0, 0))

    def lane_spec(rows):  # blocked along the lane (batch) axis
        return pl.BlockSpec((rows, tile), lambda i: (0, i))

    in_specs = ([smem_spec, smem_spec, lane_spec(stream.shape[0])]
                + [full_spec(params['A'][t]) for t in range(T)]
                + [full_spec(params['B'][t]) for t in range(T)]
                + [full_spec(G[t]) for t in range(1, T)]
                + [full_spec(params['Az']), full_spec(params['Bz']), full_spec(AzAz)])
    out_specs = [lane_spec(1), lane_spec(D[-2])]
    out_shape = (jax.ShapeDtypeStruct((1, bs_pad), jnp.float32),      # per-lane loss
                 jax.ShapeDtypeStruct((D[-2], bs_pad), jnp.float32))  # eta

    lane_loss, eta_pad = pl.pallas_call(
        kernel,
        out_shape=out_shape,
        grid=(ntiles,),
        in_specs=in_specs,
        out_specs=out_specs,
        compiler_params=pltpu.CompilerParams(dimension_semantics=("parallel",)),
    )(coef, misc, stream, *params['A'], *params['B'], *G[1:],
      params['Az'], params['Bz'], AzAz)

    # ---- Dirichlet prior loss on the (small) eta output -----------------------
    # TODO(synk): digamma/gammaln have no Pallas/Mosaic lowering; computed here in plain JAX.
    eta = eta_pad[:, :bs]                                        # drop padded lanes
    tilde = jnp.sum(eta, axis=0, keepdims=True)
    dg_eta = jax.scipy.special.digamma(eta)
    dg_tilde = jax.scipy.special.digamma(tilde)
    lg_eta = jax.scipy.special.gammaln(eta)
    lg_tilde = jax.scipy.special.gammaln(tilde)
    pri_loss = (jnp.sum((D[-2] - tilde) * dg_tilde) + jnp.sum((eta - 1.0) * dg_eta)
                + jnp.sum(lg_tilde) - jnp.sum(lg_eta)) / bs

    # single cross-lane reduce (padded lanes sliced off), plus the lane-independent
    # constant D0*0.5*sig2
    loss = jnp.sum(lane_loss[:, :bs]) + D[0] * 0.5 * sig2 + pri_loss
    return jnp.reshape(loss, (1,)), jnp.reshape(ort, (1,))


# ---------------------- deterministic parameter init --------------------------
def init_params(D, key):
    T = len(D) - 3
    ks = jax.random.split(key, 2 * T + 2)

    def kaiming_uniform(k, shape):
        # nn.init.kaiming_uniform_(a=sqrt(5)) -> U(-1/sqrt(fan_in), 1/sqrt(fan_in))
        bound = 1.0 / math.sqrt(shape[1])
        return jax.random.uniform(k, shape, jnp.float32, -bound, bound)

    A = [kaiming_uniform(ks[t], (D[t], D[t + 1])) for t in range(T)]
    B = [kaiming_uniform(ks[T + t], (D[t + 1], D[t])) for t in range(T)]
    Az = kaiming_uniform(ks[2 * T], (D[-3], D[-2]))
    Bz = kaiming_uniform(ks[2 * T + 1], (D[-2], D[-3]))
    return {'sigma': jnp.zeros((1,), jnp.float32),
            'a': jnp.linspace(-1.0, 1.0, T).astype(jnp.float32),
            'A': A, 'B': B, 'Az': Az, 'Bz': Bz}


# ---------------------- plain-JAX reference (for validation) ------------------
def reference_forward(params, x, eps_list, D):
    mm = functools.partial(jnp.matmul, precision=lax.Precision.HIGHEST)
    T = len(D) - 3
    bs = x.shape[0]
    x0 = x.reshape(bs, -1).T.astype(jnp.float32)
    a_sig = jax.nn.sigmoid(params['a'])
    sig2 = jnp.exp(params['sigma'][0])
    a_acc = a_sig[0]
    B_acc = params['B'][0]
    xt = jnp.sqrt(a_acc) * mm(B_acc, x0) + jnp.sqrt(1.0 - a_acc) * eps_list[0]
    mu = jax.nn.relu(mm(params['A'][0], xt))
    rec_loss = jnp.sum((x0 - mu) ** 2) / bs * 0.5 / sig2 + D[0] * 0.5 * sig2
    lml = 0.0
    for tt in range(1, T):
        bar_a = a_acc
        bar_B = B_acc
        a_acc = a_sig[tt] * a_acc
        B_acc = mm(params['B'][tt], B_acc)
        xt = jnp.sqrt(a_sig[tt]) * mm(params['B'][tt], xt) + jnp.sqrt(1.0 - a_sig[tt]) * eps_list[tt]
        temp_a = (1.0 - bar_a) / (1.0 - a_acc)
        xhat = jax.nn.relu(mm(params['A'][tt], xt))
        resid = xhat - mm(bar_B, x0)
        diff = (jnp.sqrt(bar_a) * resid
                - jnp.sqrt(bar_a) * a_sig[tt] * temp_a * mm(mm(params['B'][tt].T, params['B'][tt]), resid))
        temp = (jnp.sum(diff ** 2) / (1.0 - bar_a)
                + a_sig[tt] / (1.0 - a_sig[tt]) * jnp.sum(mm(params['B'][tt], diff) ** 2))
        lml = lml + 0.5 * temp / bs
    Az, Bz = params['Az'], params['Bz']
    eta = jnp.exp(mm(Bz, xt))
    tilde = jnp.sum(eta, axis=0, keepdims=True)
    eta_bar = eta / tilde
    ls_p = jnp.sum((xt - mm(Az, eta_bar)) ** 2)
    Cov = jnp.diag(jnp.sum(eta_bar / (1.0 + tilde), axis=1)) - mm(eta_bar / (1.0 + tilde), eta_bar.T)
    trACAT = jnp.trace(mm(mm(Az, Cov), Az.T))
    loss_xT = (ls_p + trACAT) * 0.5 / (1.0 - a_acc + 1e-12) / bs
    dg_eta = jax.scipy.special.digamma(eta)
    dg_t = jax.scipy.special.digamma(tilde)
    lg_eta = jax.scipy.special.gammaln(eta)
    lg_t = jax.scipy.special.gammaln(tilde)
    pri = (jnp.sum((D[-2] - tilde) * dg_t) + jnp.sum((eta - 1.0) * dg_eta)
           + jnp.sum(lg_t) - jnp.sum(lg_eta)) / bs
    loss = rec_loss + lml + loss_xT + pri
    ort = 0.0
    for tt in range(T):
        Bt = params['B'][tt]
        d = mm(Bt, Bt.T) - jnp.eye(Bt.shape[0], dtype=jnp.float32)
        ort = ort + jnp.sum(d ** 2)
    return loss, ort


if __name__ == "__main__":
    # D[0] must equal the flattened per-sample feature count; D[-1] is unused by forward.
    D = [64, 48, 32, 16, 8]            # T = len(D) - 3 = 2
    bs = 4
    T = len(D) - 3

    key = jax.random.PRNGKey(0)
    kp, kx, ke = jax.random.split(key, 3)
    params = init_params(D, kp)
    x = jax.random.normal(kx, (bs, 4, 4, 4), jnp.float32)          # NCHW, flattens to 64 features
    eps_keys = jax.random.split(ke, T)
    # torch.randn(D[t+1], bs) noise, generated deterministically outside the kernel
    eps_list = [jax.random.normal(eps_keys[t], (D[t + 1], bs), jnp.float32) for t in range(T)]

    loss, ort = diffusion_dim_reduction_forward(params, x, eps_list, D)
    jax.block_until_ready((loss, ort))

    ref_loss, ref_ort = reference_forward(params, x, eps_list, D)
    np.testing.assert_allclose(np.array(loss)[0], np.array(ref_loss), rtol=5e-3, atol=5e-3)
    np.testing.assert_allclose(np.array(ort)[0], np.array(ref_ort), rtol=5e-3, atol=5e-3)

    print("KERNEL_OK")
</pallas_src>

<mosaic_0001>
module attributes {stable_mosaic.version = 11 : i64} {
  func.func @kernel(%arg0: i32, %arg1: memref<2x6xf32, #tpu.memory_space<smem>>, %arg2: memref<2xf32, #tpu.memory_space<smem>>, %arg3: memref<144x256xf32, #tpu.memory_space<vmem>>, %arg4: memref<64x48xf32, #tpu.memory_space<vmem>>, %arg5: memref<48x32xf32, #tpu.memory_space<vmem>>, %arg6: memref<48x64xf32, #tpu.memory_space<vmem>>, %arg7: memref<32x48xf32, #tpu.memory_space<vmem>>, %arg8: memref<32x32xf32, #tpu.memory_space<vmem>>, %arg9: memref<32x16xf32, #tpu.memory_space<vmem>>, %arg10: memref<16x32xf32, #tpu.memory_space<vmem>>, %arg11: memref<32x16xf32, #tpu.memory_space<vmem>>, %arg12: memref<1x256xf32, #tpu.memory_space<vmem>>, %arg13: memref<16x256xf32, #tpu.memory_space<vmem>>) attributes {dimension_semantics = [#tpu.dimension_semantics<parallel>], iteration_bounds = array<i64: 1>, scalar_prefetch = 0 : i64, scratch_operands = 0 : i64, tpu.core_type = #tpu.core_type<tc>, window_params = [{transform_indices = @transform_0, window_bounds = array<i64: 2, 6>}, {transform_indices = @transform_1, window_bounds = array<i64: 2>}, {transform_indices = @transform_2, window_bounds = array<i64: 144, 256>}, {pipeline_mode = #tpu.pipeline_mode<synchronous>, transform_indices = @transform_3, window_bounds = array<i64: 64, 48>}, {pipeline_mode = #tpu.pipeline_mode<synchronous>, transform_indices = @transform_4, window_bounds = array<i64: 48, 32>}, {pipeline_mode = #tpu.pipeline_mode<synchronous>, transform_indices = @transform_5, window_bounds = array<i64: 48, 64>}, {pipeline_mode = #tpu.pipeline_mode<synchronous>, transform_indices = @transform_6, window_bounds = array<i64: 32, 48>}, {pipeline_mode = #tpu.pipeline_mode<synchronous>, transform_indices = @transform_7, window_bounds = array<i64: 32, 32>}, {pipeline_mode = #tpu.pipeline_mode<synchronous>, transform_indices = @transform_8, window_bounds = array<i64: 32, 16>}, {pipeline_mode = #tpu.pipeline_mode<synchronous>, transform_indices = @transform_9, window_bounds = array<i64: 16, 32>}, {pipeline_mode = #tpu.pipeline_mode<synchronous>, transform_indices = @transform_10, window_bounds = array<i64: 32, 16>}, {transform_indices = @transform_11, window_bounds = array<i64: 1, 256>}, {transform_indices = @transform_12, window_bounds = array<i64: 16, 256>}]} {
    %c0 = arith.constant 0 : index
    %c0_0 = arith.constant 0 : index
    %0 = vector.load %arg3[%c0, %c0_0] : memref<144x256xf32, #tpu.memory_space<vmem>>, vector<64x256xf32>
    %c64 = arith.constant 64 : index
    %c0_1 = arith.constant 0 : index
    %1 = vector.load %arg3[%c64, %c0_1] : memref<144x256xf32, #tpu.memory_space<vmem>>, vector<48x256xf32>
    %c0_2 = arith.constant 0 : index
    %c0_3 = arith.constant 0 : index
    %2 = vector.load %arg6[%c0_2, %c0_3] : memref<48x64xf32, #tpu.memory_space<vmem>>, vector<48x64xf32>
    %cst = arith.constant dense<0.000000e+00> : vector<48x256xf32>
    %3 = tpu.matmul %2, %0, %cst {dimension_numbers = #tpu.dot_dimension_numbers<[1], [0], [0], [1], [0, 0, 1, 1], [], []>} : vector<48x64xf32>, vector<64x256xf32>, vector<48x256xf32> -> vector<48x256xf32>
    %c0_4 = arith.constant 0 : index
    %c0_5 = arith.constant 0 : index
    %4 = memref.load %arg1[%c0_4, %c0_5] : memref<2x6xf32, #tpu.memory_space<smem>>
    %5 = vector.broadcast %4 : f32 to vector<48x256xf32>
    %6 = arith.mulf %5, %3 : vector<48x256xf32>
    %c0_6 = arith.constant 0 : index
    %c1 = arith.constant 1 : index
    %7 = memref.load %arg1[%c0_6, %c1] : memref<2x6xf32, #tpu.memory_space<smem>>
    %8 = vector.broadcast %7 : f32 to vector<48x256xf32>
    %9 = arith.mulf %8, %1 : vector<48x256xf32>
    %10 = arith.addf %6, %9 : vector<48x256xf32>
    %c0_7 = arith.constant 0 : index
    %c0_8 = arith.constant 0 : index
    %11 = vector.load %arg4[%c0_7, %c0_8] : memref<64x48xf32, #tpu.memory_space<vmem>>, vector<64x48xf32>
    %cst_9 = arith.constant dense<0.000000e+00> : vector<64x256xf32>
    %12 = tpu.matmul %11, %10, %cst_9 {dimension_numbers = #tpu.dot_dimension_numbers<[1], [0], [0], [1], [0, 0, 1, 1], [], []>} : vector<64x48xf32>, vector<48x256xf32>, vector<64x256xf32> -> vector<64x256xf32>
    %cst_10 = arith.constant 0.000000e+00 : f32
    %13 = vector.broadcast %cst_10 : f32 to vector<64x256xf32>
    %14 = arith.maximumf %12, %13 : vector<64x256xf32>
    %c0_11 = arith.constant 0 : index
    %15 = memref.load %arg2[%c0_11] : memref<2xf32, #tpu.memory_space<smem>>
    %16 = arith.subf %0, %14 : vector<64x256xf32>
    %17 = arith.mulf %16, %16 : vector<64x256xf32>
    %cst_12 = arith.constant dense<0.000000e+00> : vector<256xf32>
    %18 = vector.multi_reduction <add>, %17, %cst_12 [0] : vector<64x256xf32> to vector<256xf32>
    %19 = vector.shape_cast %18 : vector<256xf32> to vector<1x256xf32>
    %20 = vector.broadcast %15 : f32 to vector<1x256xf32>
    %21 = arith.mulf %20, %19 : vector<1x256xf32>
    %c112 = arith.constant 112 : index
    %c0_13 = arith.constant 0 : index
    %22 = vector.load %arg3[%c112, %c0_13] : memref<144x256xf32, #tpu.memory_space<vmem>>, vector<32x256xf32>
    %c0_14 = arith.constant 0 : index
    %c0_15 = arith.constant 0 : index
    %23 = vector.load %arg7[%c0_14, %c0_15] : memref<32x48xf32, #tpu.memory_space<vmem>>, vector<32x48xf32>
    %24 = tpu.concatenate %3, %10 in 1 : vector<48x256xf32>, vector<48x256xf32> -> vector<48x512xf32>
    %cst_16 = arith.constant dense<0.000000e+00> : vector<32x512xf32>
    %25 = tpu.matmul %23, %24, %cst_16 {dimension_numbers = #tpu.dot_dimension_numbers<[1], [0], [0], [1], [0, 0, 1, 1], [], []>} : vector<32x48xf32>, vector<48x512xf32>, vector<32x512xf32> -> vector<32x512xf32>
    %c1_17 = arith.constant 1 : index
    %c0_18 = arith.constant 0 : index
    %26 = memref.load %arg1[%c1_17, %c0_18] : memref<2x6xf32, #tpu.memory_space<smem>>
    %27 = vector.extract_strided_slice %25 {offsets = [0, 256], sizes = [32, 256], strides = [1, 1]} : vector<32x512xf32> to vector<32x256xf32>
    %28 = vector.broadcast %26 : f32 to vector<32x256xf32>
    %29 = arith.mulf %28, %27 : vector<32x256xf32>
    %c1_19 = arith.constant 1 : index
    %c1_20 = arith.constant 1 : index
    %30 = memref.load %arg1[%c1_19, %c1_20] : memref<2x6xf32, #tpu.memory_space<smem>>
    %31 = vector.broadcast %30 : f32 to vector<32x256xf32>
    %32 = arith.mulf %31, %22 : vector<32x256xf32>
    %33 = arith.addf %29, %32 : vector<32x256xf32>
    %c0_21 = arith.constant 0 : index
    %c0_22 = arith.constant 0 : index
    %34 = vector.load %arg5[%c0_21, %c0_22] : memref<48x32xf32, #tpu.memory_space<vmem>>, vector<48x32xf32>
    %cst_23 = arith.constant dense<0.000000e+00> : vector<48x256xf32>
    %35 = tpu.matmul %34, %33, %cst_23 {dimension_numbers = #tpu.dot_dimension_numbers<[1], [0], [0], [1], [0, 0, 1, 1], [], []>} : vector<48x32xf32>, vector<32x256xf32>, vector<48x256xf32> -> vector<48x256xf32>
    %cst_24 = arith.constant 0.000000e+00 : f32
    %36 = vector.broadcast %cst_24 : f32 to vector<48x256xf32>
    %37 = arith.maximumf %35, %36 : vector<48x256xf32>
    %38 = arith.subf %37, %3 : vector<48x256xf32>
    %cst_25 = arith.constant dense<0.000000e+00> : vector<32x256xf32>
    %39 = tpu.matmul %23, %38, %cst_25 {dimension_numbers = #tpu.dot_dimension_numbers<[1], [0], [0], [1], [0, 0, 1, 1], [], []>} : vector<32x48xf32>, vector<48x256xf32>, vector<32x256xf32> -> vector<32x256xf32>
    %c0_26 = arith.constant 0 : index
    %c0_27 = arith.constant 0 : index
    %40 = vector.load %arg8[%c0_26, %c0_27] : memref<32x32xf32, #tpu.memory_space<vmem>>, vector<32x32xf32>
    %cst_28 = arith.constant dense<0.000000e+00> : vector<32x256xf32>
    %41 = tpu.matmul %40, %39, %cst_28 {dimension_numbers = #tpu.dot_dimension_numbers<[1], [0], [0], [1], [0, 0, 1, 1], [], []>} : vector<32x32xf32>, vector<32x256xf32>, vector<32x256xf32> -> vector<32x256xf32>
    %c1_29 = arith.constant 1 : index
    %c2 = arith.constant 2 : index
    %42 = memref.load %arg1[%c1_29, %c2] : memref<2x6xf32, #tpu.memory_space<smem>>
    %43 = arith.mulf %38, %38 : vector<48x256xf32>
    %cst_30 = arith.constant dense<0.000000e+00> : vector<256xf32>
    %44 = vector.multi_reduction <add>, %43, %cst_30 [0] : vector<48x256xf32> to vector<256xf32>
    %45 = vector.shape_cast %44 : vector<256xf32> to vector<1x256xf32>
    %46 = vector.broadcast %42 : f32 to vector<1x256xf32>
    %47 = arith.mulf %46, %45 : vector<1x256xf32>
    %c1_31 = arith.constant 1 : index
    %c3 = arith.constant 3 : index
    %48 = memref.load %arg1[%c1_31, %c3] : memref<2x6xf32, #tpu.memory_space<smem>>
    %49 = arith.mulf %39, %39 : vector<32x256xf32>
    %cst_32 = arith.constant dense<0.000000e+00> : vector<256xf32>
    %50 = vector.multi_reduction <add>, %49, %cst_32 [0] : vector<32x256xf32> to vector<256xf32>
    %51 = vector.shape_cast %50 : vector<256xf32> to vector<1x256xf32>
    %52 = vector.broadcast %48 : f32 to vector<1x256xf32>
    %53 = arith.mulf %52, %51 : vector<1x256xf32>
    %54 = arith.addf %47, %53 : vector<1x256xf32>
    %c1_33 = arith.constant 1 : index
    %c4 = arith.constant 4 : index
    %55 = memref.load %arg1[%c1_33, %c4] : memref<2x6xf32, #tpu.memory_space<smem>>
    %56 = arith.mulf %39, %41 : vector<32x256xf32>
    %cst_34 = arith.constant dense<0.000000e+00> : vector<256xf32>
    %57 = vector.multi_reduction <add>, %56, %cst_34 [0] : vector<32x256xf32> to vector<256xf32>
    %58 = vector.shape_cast %57 : vector<256xf32> to vector<1x256xf32>
    %59 = vector.broadcast %55 : f32 to vector<1x256xf32>
    %60 = arith.mulf %59, %58 : vector<1x256xf32>
    %61 = arith.addf %54, %60 : vector<1x256xf32>
    %c1_35 = arith.constant 1 : index
    %c5 = arith.constant 5 : index
    %62 = memref.load %arg1[%c1_35, %c5] : memref<2x6xf32, #tpu.memory_space<smem>>
    %63 = arith.mulf %41, %41 : vector<32x256xf32>
    %cst_36 = arith.constant dense<0.000000e+00> : vector<256xf32>
    %64 = vector.multi_reduction <add>, %63, %cst_36 [0] : vector<32x256xf32> to vector<256xf32>
    %65 = vector.shape_cast %64 : vector<256xf32> to vector<1x256xf32>
    %66 = vector.broadcast %62 : f32 to vector<1x256xf32>
    %67 = arith.mulf %66, %65 : vector<1x256xf32>
    %68 = arith.addf %61, %67 : vector<1x256xf32>
    %69 = arith.addf %21, %68 : vector<1x256xf32>
    %c0_37 = arith.constant 0 : index
    %c0_38 = arith.constant 0 : index
    %70 = vector.load %arg10[%c0_37, %c0_38] : memref<16x32xf32, #tpu.memory_space<vmem>>, vector<16x32xf32>
    %cst_39 = arith.constant dense<0.000000e+00> : vector<16x256xf32>
    %71 = tpu.matmul %70, %33, %cst_39 {dimension_numbers = #tpu.dot_dimension_numbers<[1], [0], [0], [1], [0, 0, 1, 1], [], []>} : vector<16x32xf32>, vector<32x256xf32>, vector<16x256xf32> -> vector<16x256xf32>
    %72 = math.exp %71 : vector<16x256xf32>
    %c0_40 = arith.constant 0 : index
    %c0_41 = arith.constant 0 : index
    %73 = vector.load %arg13[%c0_40, %c0_41] : memref<16x256xf32, #tpu.memory_space<vmem>>, vector<16x256xf32>
    tpu.vector_store %arg13[%c0_40, %c0_41], %72 {strides = array<i32>} : memref<16x256xf32, #tpu.memory_space<vmem>>, vector<16x256xf32>,
    %cst_42 = arith.constant dense<0.000000e+00> : vector<256xf32>
    %74 = vector.multi_reduction <add>, %72, %cst_42 [0] : vector<16x256xf32> to vector<256xf32>
    %75 = vector.shape_cast %74 : vector<256xf32> to vector<1x256xf32>
    %76 = tpu.reciprocal %75 {approx = true} : vector<1x256xf32> -> vector<1x256xf32>
    %77 = vector.broadcast %76 : vector<1x256xf32> to vector<16x256xf32>
    %78 = arith.mulf %72, %77 : vector<16x256xf32>
    %cst_43 = arith.constant 1.000000e+00 : f32
    %79 = vector.broadcast %cst_43 : f32 to vector<1x256xf32>
    %80 = arith.addf %79, %75 : vector<1x256xf32>
    %81 = tpu.reciprocal %80 {approx = true} : vector<1x256xf32> -> vector<1x256xf32>
    %82 = vector.broadcast %81 : vector<1x256xf32> to vector<16x256xf32>
    %83 = arith.mulf %78, %82 : vector<16x256xf32>
    %c0_44 = arith.constant 0 : index
    %c0_45 = arith.constant 0 : index
    %84 = vector.load %arg9[%c0_44, %c0_45] : memref<32x16xf32, #tpu.memory_space<vmem>>, vector<32x16xf32>
    %85 = tpu.concatenate %78, %83 in 1 : vector<16x256xf32>, vector<16x256xf32> -> vector<16x512xf32>
    %cst_46 = arith.constant dense<0.000000e+00> : vector<32x512xf32>
    %86 = tpu.matmul %84, %85, %cst_46 {dimension_numbers = #tpu.dot_dimension_numbers<[1], [0], [0], [1], [0, 0, 1, 1], [], []>} : vector<32x16xf32>, vector<16x512xf32>, vector<32x512xf32> -> vector<32x512xf32>
    %87 = vector.extract_strided_slice %86 {offsets = [0, 0], sizes = [32, 256], strides = [1, 1]} : vector<32x512xf32> to vector<32x256xf32>
    %88 = vector.extract_strided_slice %86 {offsets = [0, 256], sizes = [32, 256], strides = [1, 1]} : vector<32x512xf32> to vector<32x256xf32>
    %89 = arith.subf %33, %87 : vector<32x256xf32>
    %90 = arith.mulf %89, %89 : vector<32x256xf32>
    %cst_47 = arith.constant dense<0.000000e+00> : vector<256xf32>
    %91 = vector.multi_reduction <add>, %90, %cst_47 [0] : vector<32x256xf32> to vector<256xf32>
    %92 = vector.shape_cast %91 : vector<256xf32> to vector<1x256xf32>
    %c0_48 = arith.constant 0 : index
    %c0_49 = arith.constant 0 : index
    %93 = vector.load %arg11[%c0_48, %c0_49] : memref<32x16xf32, #tpu.memory_space<vmem>>, vector<32x16xf32>
    %cst_50 = arith.constant dense<0.000000e+00> : vector<32x256xf32>
    %94 = tpu.matmul %93, %83, %cst_50 {dimension_numbers = #tpu.dot_dimension_numbers<[1], [0], [0], [1], [0, 0, 1, 1], [], []>} : vector<32x16xf32>, vector<16x256xf32>, vector<32x256xf32> -> vector<32x256xf32>
    %cst_51 = arith.constant dense<0.000000e+00> : vector<256xf32>
    %95 = vector.multi_reduction <add>, %94, %cst_51 [0] : vector<32x256xf32> to vector<256xf32>
    %96 = vector.shape_cast %95 : vector<256xf32> to vector<1x256xf32>
    %97 = arith.mulf %88, %87 : vector<32x256xf32>
    %cst_52 = arith.constant dense<0.000000e+00> : vector<256xf32>
    %98 = vector.multi_reduction <add>, %97, %cst_52 [0] : vector<32x256xf32> to vector<256xf32>
    %99 = vector.shape_cast %98 : vector<256xf32> to vector<1x256xf32>
    %c1_53 = arith.constant 1 : index
    %100 = memref.load %arg2[%c1_53] : memref<2xf32, #tpu.memory_space<smem>>
    %101 = arith.addf %92, %96 : vector<1x256xf32>
    %102 = arith.subf %101, %99 : vector<1x256xf32>
    %103 = vector.broadcast %100 : f32 to vector<1x256xf32>
    %104 = arith.mulf %103, %102 : vector<1x256xf32>
    %105 = arith.addf %69, %104 : vector<1x256xf32>
    %c0_54 = arith.constant 0 : index
    %c0_55 = arith.constant 0 : index
    %106 = vector.load %arg12[%c0_54, %c0_55] : memref<1x256xf32, #tpu.memory_space<vmem>>, vector<1x256xf32>
    tpu.vector_store %arg12[%c0_54, %c0_55], %105 {strides = array<i32>} : memref<1x256xf32, #tpu.memory_space<vmem>>, vector<1x256xf32>,
    return
  }
  func.func @transform_0(%arg0: i32) -> (i32, i32) {
    %c0_i32 = arith.constant 0 : i32
    %c0_i32_0 = arith.constant 0 : i32
    %c0_i32_1 = arith.constant 0 : i32
    return %c0_i32, %c0_i32_0 : i32, i32
  }
  func.func @transform_1(%arg0: i32) -> i32 {
    %c0_i32 = arith.constant 0 : i32
    %c0_i32_0 = arith.constant 0 : i32
    return %c0_i32 : i32
  }
  func.func @transform_2(%arg0: i32) -> (i32, i32) {
    %c0_i32 = arith.constant 0 : i32
    %c0_i32_0 = arith.constant 0 : i32
    return %c0_i32, %arg0 : i32, i32
  }
  func.func @transform_3(%arg0: i32) -> (i32, i32) {
    %c0_i32 = arith.constant 0 : i32
    %c0_i32_0 = arith.constant 0 : i32
    %c0_i32_1 = arith.constant 0 : i32
    return %c0_i32, %c0_i32_0 : i32, i32
  }
  func.func @transform_4(%arg0: i32) -> (i32, i32) {
    %c0_i32 = arith.constant 0 : i32
    %c0_i32_0 = arith.constant 0 : i32
    %c0_i32_1 = arith.constant 0 : i32
    return %c0_i32, %c0_i32_0 : i32, i32
  }
  func.func @transform_5(%arg0: i32) -> (i32, i32) {
    %c0_i32 = arith.constant 0 : i32
    %c0_i32_0 = arith.constant 0 : i32
    %c0_i32_1 = arith.constant 0 : i32
    return %c0_i32, %c0_i32_0 : i32, i32
  }
  func.func @transform_6(%arg0: i32) -> (i32, i32) {
    %c0_i32 = arith.constant 0 : i32
    %c0_i32_0 = arith.constant 0 : i32
    %c0_i32_1 = arith.constant 0 : i32
    return %c0_i32, %c0_i32_0 : i32, i32
  }
  func.func @transform_7(%arg0: i32) -> (i32, i32) {
    %c0_i32 = arith.constant 0 : i32
    %c0_i32_0 = arith.constant 0 : i32
    %c0_i32_1 = arith.constant 0 : i32
    return %c0_i32, %c0_i32_0 : i32, i32
  }
  func.func @transform_8(%arg0: i32) -> (i32, i32) {
    %c0_i32 = arith.constant 0 : i32
    %c0_i32_0 = arith.constant 0 : i32
    %c0_i32_1 = arith.constant 0 : i32
    return %c0_i32, %c0_i32_0 : i32, i32
  }
  func.func @transform_9(%arg0: i32) -> (i32, i32) {
    %c0_i32 = arith.constant 0 : i32
    %c0_i32_0 = arith.constant 0 : i32
    %c0_i32_1 = arith.constant 0 : i32
    return %c0_i32, %c0_i32_0 : i32, i32
  }
  func.func @transform_10(%arg0: i32) -> (i32, i32) {
    %c0_i32 = arith.constant 0 : i32
    %c0_i32_0 = arith.constant 0 : i32
    %c0_i32_1 = arith.constant 0 : i32
    return %c0_i32, %c0_i32_0 : i32, i32
  }
  func.func @transform_11(%arg0: i32) -> (i32, i32) {
    %c0_i32 = arith.constant 0 : i32
    %c0_i32_0 = arith.constant 0 : i32
    return %c0_i32, %arg0 : i32, i32
  }
  func.func @transform_12(%arg0: i32) -> (i32, i32) {
    %c0_i32 = arith.constant 0 : i32
    %c0_i32_0 = arith.constant 0 : i32
    return %c0_i32, %arg0 : i32, i32
  }
}

</mosaic_0001>

<llo_original>
// kernel: tpu_custom_call.1
$region0: #{tpu_custom_call.1}
  #allocation0 [shape = 'u32[]', space=smem, size = 0x4, offset = 0x4, fixed_abs, tag = 'smem constant byte address 0x4 - core index']
  #allocation1 [shape = 'u32[144,128]{1,0:T(1,128)}', space=vmem, size = 0x12000, scoped, tag = 'internal scratch']
  %s0 = inlined_call_operand.hbm [shape: f32[2,6], index: 0, kind: input, shape index: {}]
  %s1 = inlined_call_operand.hbm [shape: f32[2], index: 1, kind: input, shape index: {}]
  %s2 = inlined_call_operand.vmem [shape: f32[144,256], index: 2, kind: input, shape index: {}]
  %s3 = inlined_call_operand.vmem [shape: f32[64,48], index: 3, kind: input, shape index: {}]
  %s4 = inlined_call_operand.vmem [shape: f32[48,32], index: 4, kind: input, shape index: {}]
  %s5 = inlined_call_operand.hbm [shape: f32[48,64], index: 5, kind: input, shape index: {}]
  %s6 = inlined_call_operand.hbm [shape: f32[32,48], index: 6, kind: input, shape index: {}]
  %s7 = inlined_call_operand.hbm [shape: f32[32,32], index: 7, kind: input, shape index: {}]
  %s8 = inlined_call_operand.vmem [shape: f32[32,16], index: 8, kind: input, shape index: {}]
  %s9 = inlined_call_operand.hbm [shape: f32[16,32], index: 9, kind: input, shape index: {}]
  %s10 = inlined_call_operand.vmem [shape: f32[32,16], index: 10, kind: input, shape index: {}]
  %s11 = inlined_call_operand.hbm [shape: f32[1,256], index: 11, kind: output, shape index: {0}]
  %s12 = inlined_call_operand.hbm [shape: f32[16,256], index: 12, kind: output, shape index: {1}]
  %13 = xla_tuple %s11, %s12
  %s14 = sld [smem:[#allocation0]]
  $region86: #{tpu_custom_call.1} parent=0
    _
  %s16 = ssub.s32 1, %s14
  %s17 = scalar_select 0, %s16, %s14
  $region1: #{tpu_custom_call.1} parent=0
    #allocation2 [shape = 'u8[1024]{0}', space=smem, size = 0x400, scoped, tag = 'input window, operand 0, single buffered']
    #allocation3 [shape = 's32[1]{0}', space=sflag, size = 0x4, scoped, tag = 'scoped memory for tpu_custom_call.1']
    #allocation4 [shape = 's32[1]{0}', space=sflag, size = 0x4, scoped, tag = 'scoped memory for tpu_custom_call.1']
    #allocation5 [shape = 's32[1]{0}', space=sflag, size = 0x4, scoped, tag = 'scoped memory for tpu_custom_call.1']
    #allocation6 [shape = 'u8[512]{0}', space=smem, size = 0x200, scoped, tag = 'input window, operand 1, single buffered']
    #allocation7 [shape = 's32[1]{0}', space=sflag, size = 0x4, scoped, tag = 'scoped memory for tpu_custom_call.1']
    #allocation8 [shape = 'u8[24576]{0}', space=vmem, size = 0x6000, scoped, tag = 'input window, operand 5, single buffered']
    #allocation9 [shape = 'u8[16384]{0}', space=vmem, size = 0x4000, scoped, tag = 'input window, operand 6, single buffered']
    #allocation10 [shape = 's32[1]{0}', space=sflag, size = 0x4, scoped, tag = 'scoped memory for tpu_custom_call.1']
    #allocation11 [shape = 'u8[16384]{0}', space=vmem, size = 0x4000, scoped, tag = 'input window, operand 7, single buffered']
    #allocation12 [shape = 'u8[8192]{0}', space=vmem, size = 0x2000, scoped, tag = 'input window, operand 9, single buffered']
    #allocation13 [shape = 's32[1]{0}', space=sflag, size = 0x4, scoped, tag = 'scoped memory for tpu_custom_call.1']
    #allocation14 [shape = 'u8[1024]{0}', space=vmem, size = 0x400, scoped, tag = 'output window, operand 0, single buffered']
    #allocation15 [shape = 'u8[16384]{0}', space=vmem, size = 0x4000, scoped, tag = 'output window, operand 1, single buffered']
    #allocation16 [shape = 's32[1]{0}', space=sflag, size = 0x4, scoped, tag = 'scoped memory for tpu_custom_call.1']
    %18 = vsyncpa [#allocation5], 0
    %19 = vsyncpa [#allocation7], 0
    %20 = vsyncpa [#allocation3], 0
    %21 = vsyncpa [#allocation10], 0
    %22 = vsyncpa [#allocation13], 0
    %23 = vsyncpa [#allocation4], 0
    %24 = vsyncpa [#allocation16], 0
    // Predicated region
    $region2: #{tpu_custom_call.1} parent=1 // pred_check
      _
    $region3: #{tpu_custom_call.1} parent=1 // pred_check_branch
      %26 = sbr.rel (0) target = $region5
    $region4: #{tpu_custom_call.1} parent=1 // pred_region
      %s28 = ssub.s32 32, 32
      %29 = vsyncadd [#allocation5], %s28
      %32 = dma.hbm_to_smem %s0, 32, [#allocation2], [#allocation5]
    $region5: #{tpu_custom_call.1} parent=1 // pred_fallthru
      _
    // Predicated region
    $region6: #{tpu_custom_call.1} parent=1 // pred_check
      _
    $region7: #{tpu_custom_call.1} parent=1 // pred_check_branch
      %34 = sbr.rel (0) target = $region9
    $region8: #{tpu_custom_call.1} parent=1 // pred_region
      %s36 = ssub.s32 16, 16
      %37 = vsyncadd [#allocation7], %s36
      %40 = dma.hbm_to_smem %s1, 16, [#allocation6], [#allocation7]
    $region9: #{tpu_custom_call.1} parent=1 // pred_fallthru
      _
    // Predicated region
    $region10: #{tpu_custom_call.1} parent=1 // pred_check
      _
    $region11: #{tpu_custom_call.1} parent=1 // pred_check_branch
      %42 = sbr.rel (0) target = $region13
    $region12: #{tpu_custom_call.1} parent=1 // pred_region
      _
    $region13: #{tpu_custom_call.1} parent=1 // pred_fallthru
      _
    // Predicated region
    $region14: #{tpu_custom_call.1} parent=1 // pred_check
      _
    $region15: #{tpu_custom_call.1} parent=1 // pred_check_branch
      %44 = sbr.rel (0) target = $region17
    $region16: #{tpu_custom_call.1} parent=1 // pred_region
      _
    $region17: #{tpu_custom_call.1} parent=1 // pred_fallthru
      _
    // Predicated region
    $region18: #{tpu_custom_call.1} parent=1 // pred_check
      _
    $region19: #{tpu_custom_call.1} parent=1 // pred_check_branch
      %46 = sbr.rel (0) target = $region21
    $region20: #{tpu_custom_call.1} parent=1 // pred_region
      _
    $region21: #{tpu_custom_call.1} parent=1 // pred_fallthru
      _
    // Predicated region
    $region22: #{tpu_custom_call.1} parent=1 // pred_check
      _
    $region23: #{tpu_custom_call.1} parent=1 // pred_check_branch
      %48 = sbr.rel (0) target = $region25
    $region24: #{tpu_custom_call.1} parent=1 // pred_region
      %s50 = ssub.s32 768, 768
      %51 = vsyncadd [#allocation3], %s50
      %s52 = sshll.u32 [#allocation8], 4
      %s53 = int_to_ptr.vmem [resolvable:$true] %s52
      %58 = dma.hbm_to_vmem [thread:$0]  %s5, 768, %s53, [#allocation3], 128, 128, 8
    $region25: #{tpu_custom_call.1} parent=1 // pred_fallthru
      _
    // Predicated region
    $region26: #{tpu_custom_call.1} parent=1 // pred_check
      _
    $region27: #{tpu_custom_call.1} parent=1 // pred_check_branch
      %60 = sbr.rel (0) target = $region29
    $region28: #{tpu_custom_call.1} parent=1 // pred_region
      %s62 = ssub.s32 512, 512
      %63 = vsyncadd [#allocation10], %s62
      %s64 = sshll.u32 [#allocation9], 4
      %s65 = int_to_ptr.vmem [resolvable:$true] %s64
      %70 = dma.hbm_to_vmem [thread:$0]  %s6, 512, %s65, [#allocation10], 128, 128, 8
    $region29: #{tpu_custom_call.1} parent=1 // pred_fallthru
      _
    // Predicated region
    $region30: #{tpu_custom_call.1} parent=1 // pred_check
      _
    $region31: #{tpu_custom_call.1} parent=1 // pred_check_branch
      %72 = sbr.rel (0) target = $region33
    $region32: #{tpu_custom_call.1} parent=1 // pred_region
      %s74 = ssub.s32 512, 512
      %75 = vsyncadd [#allocation10], %s74
      %s76 = sshll.u32 [#allocation11], 4
      %s77 = int_to_ptr.vmem [resolvable:$true] %s76
      %82 = dma.hbm_to_vmem [thread:$0]  %s7, 512, %s77, [#allocation10], 128, 128, 8
    $region33: #{tpu_custom_call.1} parent=1 // pred_fallthru
      _
    // Predicated region
    $region34: #{tpu_custom_call.1} parent=1 // pred_check
      _
    $region35: #{tpu_custom_call.1} parent=1 // pred_check_branch
      %84 = sbr.rel (0) target = $region37
    $region36: #{tpu_custom_call.1} parent=1 // pred_region
      _
    $region37: #{tpu_custom_call.1} parent=1 // pred_fallthru
      _
    // Predicated region
    $region38: #{tpu_custom_call.1} parent=1 // pred_check
      _
    $region39: #{tpu_custom_call.1} parent=1 // pred_check_branch
      %86 = sbr.rel (0) target = $region41
    $region40: #{tpu_custom_call.1} parent=1 // pred_region
      %s88 = ssub.s32 256, 256
      %89 = vsyncadd [#allocation13], %s88
      %s90 = sshll.u32 [#allocation12], 4
      %s91 = int_to_ptr.vmem [resolvable:$true] %s90
      %96 = dma.hbm_to_vmem [thread:$0]  %s9, 256, %s91, [#allocation13], 128, 128, 8
    $region41: #{tpu_custom_call.1} parent=1 // pred_fallthru
      _
    // Predicated region
    $region42: #{tpu_custom_call.1} parent=1 // pred_check
      _
    $region43: #{tpu_custom_call.1} parent=1 // pred_check_branch
      %98 = sbr.rel (0) target = $region45
    $region44: #{tpu_custom_call.1} parent=1 // pred_region
      _
    $region45: #{tpu_custom_call.1} parent=1 // pred_fallthru
      _
    // Predicated region
    $region46: #{tpu_custom_call.1} parent=1 // pred_check
      _
    $region47: #{tpu_custom_call.1} parent=1 // pred_check_branch
      %100 = sbr.rel (0) target = $region49
    $region48: #{tpu_custom_call.1} parent=1 // pred_region
      %101 = dma.done [#allocation5], 32
    $region49: #{tpu_custom_call.1} parent=1 // pred_fallthru
      _
    // Predicated region
    $region50: #{tpu_custom_call.1} parent=1 // pred_check
      _
    $region51: #{tpu_custom_call.1} parent=1 // pred_check_branch
      %103 = sbr.rel (0) target = $region53
    $region52: #{tpu_custom_call.1} parent=1 // pred_region
      %104 = dma.done [#allocation7], 16
    $region53: #{tpu_custom_call.1} parent=1 // pred_fallthru
      _
    // Predicated region
    $region54: #{tpu_custom_call.1} parent=1 // pred_check
      _
    $region55: #{tpu_custom_call.1} parent=1 // pred_check_branch
      %106 = sbr.rel (0) target = $region57
    $region56: #{tpu_custom_call.1} parent=1 // pred_region
      %107 = dma.done [#allocation3], 768
    $region57: #{tpu_custom_call.1} parent=1 // pred_fallthru
      _
    // Predicated region
    $region58: #{tpu_custom_call.1} parent=1 // pred_check
      _
    $region59: #{tpu_custom_call.1} parent=1 // pred_check_branch
      %109 = sbr.rel (0) target = $region61
    $region60: #{tpu_custom_call.1} parent=1 // pred_region
      %110 = dma.done [#allocation10], 512
    $region61: #{tpu_custom_call.1} parent=1 // pred_fallthru
      _
    // Predicated region
    $region62: #{tpu_custom_call.1} parent=1 // pred_check
      _
    $region63: #{tpu_custom_call.1} parent=1 // pred_check_branch
      %112 = sbr.rel (0) target = $region65
    $region64: #{tpu_custom_call.1} parent=1 // pred_region
      %113 = dma.done [#allocation10], 512
    $region65: #{tpu_custom_call.1} parent=1 // pred_fallthru
      _
    // Predicated region
    $region66: #{tpu_custom_call.1} parent=1 // pred_check
      _
    $region67: #{tpu_custom_call.1} parent=1 // pred_check_branch
      %115 = sbr.rel (0) target = $region69
    $region68: #{tpu_custom_call.1} parent=1 // pred_region
      %116 = dma.done [#allocation13], 256
    $region69: #{tpu_custom_call.1} parent=1 // pred_fallthru
      _
    %117 = sfence
    %v118 = vld [vmem:[%s2] sm:$0xff]
    %v119 = vld [vmem:[%s2 + $0x8] sm:$0xff]
    %v120 = vld [vmem:[%s2 + $0x10] sm:$0xff]
    %v121 = vld [vmem:[%s2 + $0x18] sm:$0xff]
    %v122 = vld [vmem:[%s2 + $0x20] sm:$0xff]
    %v123 = vld [vmem:[%s2 + $0x28] sm:$0xff]
    %v124 = vld [vmem:[%s2 + $0x30] sm:$0xff]
    %v125 = vld [vmem:[%s2 + $0x38] sm:$0xff]
    %v126 = vld [vmem:[%s2 + $0x40] sm:$0xff]
    %v127 = vld [vmem:[%s2 + $0x48] sm:$0xff]
    %v128 = vld [vmem:[%s2 + $0x50] sm:$0xff]
    %v129 = vld [vmem:[%s2 + $0x58] sm:$0xff]
    %v130 = vld [vmem:[%s2 + $0x60] sm:$0xff]
    %v131 = vld [vmem:[%s2 + $0x68] sm:$0xff]
    %v132 = vld [vmem:[%s2 + $0x70] sm:$0xff]
    %v133 = vld [vmem:[%s2 + $0x78] sm:$0xff]
    %v134 = vld [vmem:[%s2 + $0x80] sm:$0xff]
    %v135 = vld [vmem:[%s2 + $0x88] sm:$0xff]
    %v136 = vld [vmem:[%s2 + $0x90] sm:$0xff]
    %v137 = vld [vmem:[%s2 + $0x98] sm:$0xff]
    %v138 = vld [vmem:[%s2 + $0xa0] sm:$0xff]
    %v139 = vld [vmem:[%s2 + $0xa8] sm:$0xff]
    %v140 = vld [vmem:[%s2 + $0xb0] sm:$0xff]
    %v141 = vld [vmem:[%s2 + $0xb8] sm:$0xff]
    %v142 = vld [vmem:[%s2 + $0xc0] sm:$0xff]
    %v143 = vld [vmem:[%s2 + $0xc8] sm:$0xff]
    %v144 = vld [vmem:[%s2 + $0xd0] sm:$0xff]
    %v145 = vld [vmem:[%s2 + $0xd8] sm:$0xff]
    %v146 = vld [vmem:[#allocation8] sm:$0xff]
    %v147 = vld [vmem:[#allocation8 + $0x8] sm:$0xff]
    %v148 = vld [vmem:[#allocation8 + $0x10] sm:$0xff]
    %v149 = vld [vmem:[#allocation8 + $0x18] sm:$0xff]
    %v150 = vld [vmem:[#allocation8 + $0x20] sm:$0xff]
    %v151 = vld [vmem:[#allocation8 + $0x28] sm:$0xff]
    %vm152 = vcmask 523264
    %v154 = vsel %vm152, %v146, 0
    %v157 = vsel %vm152, %v147, 0
    %v160 = vsel %vm152, %v148, 0
    %v163 = vsel %vm152, %v149, 0
    %v166 = vsel %vm152, %v150, 0
    %v169 = vsel %vm152, %v151, 0
    %171 = vmatprep.subr.mxu0 0.0
    %172 = vmatpush1.msra.mxu0 0.0
    %173 = vmatprep.subr.mxu0 0.0
    %174 = vmatpush1.msra.mxu0 0.0
    %175 = vmatprep.subr.mxu0 0.0
    %176 = vmatpush1.msra.mxu0 0.0
    %177 = vmatprep.subr.mxu0 0.0
    %178 = vmatpush1.msra.mxu0 0.0
    %179 = vmatprep.subr.mxu0 0.0
    %180 = vmatpush1.msra.mxu0 0.0
    %181 = vmatprep.subr.mxu0 0.0
    %182 = vmatpush1.msra.mxu0 0.0
    %183 = vmatprep.subr.mxu0 0.0
    %184 = vmatpush1.msra.mxu0 0.0
    %185 = vmatprep.subr.mxu0 0.0
    %186 = vmatpush1.msra.mxu0 0.0
    %187 = vmatprep.subr.mxu0 %v133
    %188 = vmatpush1.msra.mxu0 %v132
    %189 = vmatprep.subr.mxu0 %v131
    %190 = vmatpush1.msra.mxu0 %v130
    %191 = vmatprep.subr.mxu0 %v129
    %192 = vmatpush1.msra.mxu0 %v128
    %193 = vmatprep.subr.mxu0 %v127
    %194 = vmatpush1.msra.mxu0 %v126
    %195 = vmatprep.subr.mxu0 %v125
    %196 = vmatpush1.msra.mxu0 %v124
    %197 = vmatprep.subr.mxu0 %v123
    %198 = vmatpush1.msra.mxu0 %v122
    %199 = vmatprep.subr.mxu0 %v121
    %200 = vmatpush1.msra.mxu0 %v120
    %201 = vmatprep.subr.mxu0 %v119
    %202 = vmatpush1.msra.mxu0 %v118
    %203 = vmatprep.subr.mxu0 0.0
    %204 = vmatpush2.msra.mxu0 0.0
    %205 = vmatprep.subr.mxu0 0.0
    %206 = vmatpush2.msra.mxu0 0.0
    %207 = vmatprep.subr.mxu0 0.0
    %208 = vmatpush2.msra.mxu0 0.0
    %209 = vmatprep.subr.mxu0 0.0
    %210 = vmatpush2.msra.mxu0 0.0
    %211 = vmatprep.subr.mxu0 0.0
    %212 = vmatpush2.msra.mxu0 0.0
    %213 = vmatprep.subr.mxu0 0.0
    %214 = vmatpush2.msra.mxu0 0.0
    %215 = vmatprep.subr.mxu0 0.0
    %216 = vmatpush2.msra.mxu0 0.0
    %217 = vmatprep.subr.mxu0 0.0
    %218 = vmatpush2.msra.mxu0 0.0
    %219 = vmatprep.subr.mxu0 0.0
    %220 = vmatpush2.msra.mxu0 0.0
    %221 = vmatprep.subr.mxu0 0.0
    %222 = vmatpush2.msra.mxu0 0.0
    %223 = vmatprep.subr.mxu0 0.0
    %224 = vmatpush2.msra.mxu0 0.0
    %225 = vmatprep.subr.mxu0 0.0
    %226 = vmatpush2.msra.mxu0 0.0
    %227 = vmatprep.subr.mxu0 0.0
    %228 = vmatpush2.msra.mxu0 0.0
    %229 = vmatprep.subr.mxu0 0.0
    %230 = vmatpush2.msra.mxu0 0.0
    %231 = vmatprep.subr.mxu0 0.0
    %232 = vmatpush2.msra.mxu0 0.0
    %233 = vmatprep.subr.mxu0 0.0
    %234 = vmatpush2.msra.mxu0 0.0
    %235 = vmatprep.mubr.f32.mxu0 0.0
    %236 = vmatmul.mubr.f32.gmra.mxu0 %v154
    %v237 = vpop.f32.mrf.mxu0
    %v238 = vadd.f32 0.0, %v237
    %v239 = vpop.f32.mrf.mxu0
    %v240 = vadd.f32 0.0, %v239
    %241 = vmatprep.mubr.f32.mxu0 0.0
    %242 = vmatmul.mubr.f32.gmra.mxu0 %v157
    %v243 = vpop.f32.mrf.mxu0
    %v244 = vadd.f32 0.0, %v243
    %v245 = vpop.f32.mrf.mxu0
    %v246 = vadd.f32 0.0, %v245
    %247 = vmatprep.mubr.f32.mxu0 0.0
    %248 = vmatmul.mubr.f32.gmra.mxu0 %v160
    %v249 = vpop.f32.mrf.mxu0
    %v250 = vadd.f32 0.0, %v249
    %v251 = vpop.f32.mrf.mxu0
    %v252 = vadd.f32 0.0, %v251
    %253 = vmatprep.mubr.f32.mxu0 0.0
    %254 = vmatmul.mubr.f32.gmra.mxu0 %v163
    %v255 = vpop.f32.mrf.mxu0
    %v256 = vadd.f32 0.0, %v255
    %v257 = vpop.f32.mrf.mxu0
    %v258 = vadd.f32 0.0, %v257
    %259 = vmatprep.mubr.f32.mxu0 0.0
    %260 = vmatmul.mubr.f32.gmra.mxu0 %v166
    %v261 = vpop.f32.mrf.mxu0
    %v262 = vadd.f32 0.0, %v261
    %v263 = vpop.f32.mrf.mxu0
    %v264 = vadd.f32 0.0, %v263
    %265 = vmatprep.mubr.f32.mxu0 0.0
    %266 = vmatmul.mubr.f32.gmra.mxu0 %v169
    %v267 = vpop.f32.mrf.mxu0
    %v268 = vadd.f32 0.0, %v267
    %v269 = vpop.f32.mrf.mxu0
    %v270 = vadd.f32 0.0, %v269
    %271 = vdwg.mxu0
    %s272 = sld [smem:[#allocation2]]
    %v273 = vstv %s272
    %v274 = vmul.f32 %v273, %v238
    %v275 = vmul.f32 %v273, %v240
    %v276 = vmul.f32 %v273, %v244
    %v277 = vmul.f32 %v273, %v246
    %v278 = vmul.f32 %v273, %v250
    %v279 = vmul.f32 %v273, %v252
    %v280 = vmul.f32 %v273, %v256
    %v281 = vmul.f32 %v273, %v258
    %v282 = vmul.f32 %v273, %v262
    %v283 = vmul.f32 %v273, %v264
    %v284 = vmul.f32 %v273, %v268
    %v285 = vmul.f32 %v273, %v270
    %s286 = sld [smem:[#allocation2 + $0x1]]
    %v287 = vstv %s286
    %v288 = vmul.f32 %v287, %v134
    %v289 = vmul.f32 %v287, %v135
    %v290 = vmul.f32 %v287, %v136
    %v291 = vmul.f32 %v287, %v137
    %v292 = vmul.f32 %v287, %v138
    %v293 = vmul.f32 %v287, %v139
    %v294 = vmul.f32 %v287, %v140
    %v295 = vmul.f32 %v287, %v141
    %v296 = vmul.f32 %v287, %v142
    %v297 = vmul.f32 %v287, %v143
    %v298 = vmul.f32 %v287, %v144
    %v299 = vmul.f32 %v287, %v145
    %v300 = vadd.f32 %v274, %v288
    %v301 = vadd.f32 %v275, %v289
    %v302 = vadd.f32 %v276, %v290
    %v303 = vadd.f32 %v277, %v291
    %v304 = vadd.f32 %v278, %v292
    %v305 = vadd.f32 %v279, %v293
    %v306 = vadd.f32 %v280, %v294
    %v307 = vadd.f32 %v281, %v295
    %v308 = vadd.f32 %v282, %v296
    %v309 = vadd.f32 %v283, %v297
    %v310 = vadd.f32 %v284, %v298
    %v311 = vadd.f32 %v285, %v299
    %v312 = vld [vmem:[%s3] sm:$0xff]
    %v313 = vld [vmem:[%s3 + $0x8] sm:$0xff]
    %v314 = vld [vmem:[%s3 + $0x10] sm:$0xff]
    %v315 = vld [vmem:[%s3 + $0x18] sm:$0xff]
    %v316 = vld [vmem:[%s3 + $0x20] sm:$0xff]
    %v317 = vld [vmem:[%s3 + $0x28] sm:$0xff]
    %v318 = vld [vmem:[%s3 + $0x30] sm:$0xff]
    %v319 = vld [vmem:[%s3 + $0x38] sm:$0xff]
    %vm320 = vcmask 392192
    %v322 = vsel %vm320, %v312, 0
    %v325 = vsel %vm320, %v313, 0
    %v328 = vsel %vm320, %v314, 0
    %v331 = vsel %vm320, %v315, 0
    %v334 = vsel %vm320, %v316, 0
    %v337 = vsel %vm320, %v317, 0
    %v340 = vsel %vm320, %v318, 0
    %v343 = vsel %vm320, %v319, 0
    %345 = vmatprep.subr.mxu0 0.0
    %346 = vmatpush1.msra.mxu0 0.0
    %347 = vmatprep.subr.mxu0 0.0
    %348 = vmatpush1.msra.mxu0 0.0
    %349 = vmatprep.subr.mxu0 0.0
    %350 = vmatpush1.msra.mxu0 0.0
    %351 = vmatprep.subr.mxu0 0.0
    %352 = vmatpush1.msra.mxu0 0.0
    %353 = vmatprep.subr.mxu0 0.0
    %354 = vmatpush1.msra.mxu0 0.0
    %355 = vmatprep.subr.mxu0 0.0
    %356 = vmatpush1.msra.mxu0 0.0
    %357 = vmatprep.subr.mxu0 0.0
    %358 = vmatpush1.msra.mxu0 0.0
    %359 = vmatprep.subr.mxu0 0.0
    %360 = vmatpush1.msra.mxu0 0.0
    %361 = vmatprep.subr.mxu0 0.0
    %362 = vmatpush1.msra.mxu0 0.0
    %363 = vmatprep.subr.mxu0 0.0
    %364 = vmatpush1.msra.mxu0 0.0
    %365 = vmatprep.subr.mxu0 %v311
    %366 = vmatpush1.msra.mxu0 %v310
    %367 = vmatprep.subr.mxu0 %v309
    %368 = vmatpush1.msra.mxu0 %v308
    %369 = vmatprep.subr.mxu0 %v307
    %370 = vmatpush1.msra.mxu0 %v306
    %371 = vmatprep.subr.mxu0 %v305
    %372 = vmatpush1.msra.mxu0 %v304
    %373 = vmatprep.subr.mxu0 %v303
    %374 = vmatpush1.msra.mxu0 %v302
    %375 = vmatprep.subr.mxu0 %v301
    %376 = vmatpush1.msra.mxu0 %v300
    %377 = vmatprep.subr.mxu0 0.0
    %378 = vmatpush2.msra.mxu0 0.0
    %379 = vmatprep.subr.mxu0 0.0
    %380 = vmatpush2.msra.mxu0 0.0
    %381 = vmatprep.subr.mxu0 0.0
    %382 = vmatpush2.msra.mxu0 0.0
    %383 = vmatprep.subr.mxu0 0.0
    %384 = vmatpush2.msra.mxu0 0.0
    %385 = vmatprep.subr.mxu0 0.0
    %386 = vmatpush2.msra.mxu0 0.0
    %387 = vmatprep.subr.mxu0 0.0
    %388 = vmatpush2.msra.mxu0 0.0
    %389 = vmatprep.subr.mxu0 0.0
    %390 = vmatpush2.msra.mxu0 0.0
    %391 = vmatprep.subr.mxu0 0.0
    %392 = vmatpush2.msra.mxu0 0.0
    %393 = vmatprep.subr.mxu0 0.0
    %394 = vmatpush2.msra.mxu0 0.0
    %395 = vmatprep.subr.mxu0 0.0
    %396 = vmatpush2.msra.mxu0 0.0
    %397 = vmatprep.subr.mxu0 0.0
    %398 = vmatpush2.msra.mxu0 0.0
    %399 = vmatprep.subr.mxu0 0.0
    %400 = vmatpush2.msra.mxu0 0.0
    %401 = vmatprep.subr.mxu0 0.0
    %402 = vmatpush2.msra.mxu0 0.0
    %403 = vmatprep.subr.mxu0 0.0
    %404 = vmatpush2.msra.mxu0 0.0
    %405 = vmatprep.subr.mxu0 0.0
    %406 = vmatpush2.msra.mxu0 0.0
    %407 = vmatprep.subr.mxu0 0.0
    %408 = vmatpush2.msra.mxu0 0.0
    %409 = vmatprep.mubr.f32.mxu0 0.0
    %410 = vmatmul.mubr.f32.gmra.mxu0 %v322
    %v411 = vpop.f32.mrf.mxu0
    %v412 = vadd.f32 0.0, %v411
    %v413 = vpop.f32.mrf.mxu0
    %v414 = vadd.f32 0.0, %v413
    %415 = vmatprep.mubr.f32.mxu0 0.0
    %416 = vmatmul.mubr.f32.gmra.mxu0 %v325
    %v417 = vpop.f32.mrf.mxu0
    %v418 = vadd.f32 0.0, %v417
    %v419 = vpop.f32.mrf.mxu0
    %v420 = vadd.f32 0.0, %v419
    %421 = vmatprep.mubr.f32.mxu0 0.0
    %422 = vmatmul.mubr.f32.gmra.mxu0 %v328
    %v423 = vpop.f32.mrf.mxu0
    %v424 = vadd.f32 0.0, %v423
    %v425 = vpop.f32.mrf.mxu0
    %v426 = vadd.f32 0.0, %v425
    %427 = vmatprep.mubr.f32.mxu0 0.0
    %428 = vmatmul.mubr.f32.gmra.mxu0 %v331
    %v429 = vpop.f32.mrf.mxu0
    %v430 = vadd.f32 0.0, %v429
    %v431 = vpop.f32.mrf.mxu0
    %v432 = vadd.f32 0.0, %v431
    %433 = vmatprep.mubr.f32.mxu0 0.0
    %434 = vmatmul.mubr.f32.gmra.mxu0 %v334
    %v435 = vpop.f32.mrf.mxu0
    %v436 = vadd.f32 0.0, %v435
    %v437 = vpop.f32.mrf.mxu0
    %v438 = vadd.f32 0.0, %v437
    %439 = vmatprep.mubr.f32.mxu0 0.0
    %440 = vmatmul.mubr.f32.gmra.mxu0 %v337
    %v441 = vpop.f32.mrf.mxu0
    %v442 = vadd.f32 0.0, %v441
    %v443 = vpop.f32.mrf.mxu0
    %v444 = vadd.f32 0.0, %v443
    %445 = vmatprep.mubr.f32.mxu0 0.0
    %446 = vmatmul.mubr.f32.gmra.mxu0 %v340
    %v447 = vpop.f32.mrf.mxu0
    %v448 = vadd.f32 0.0, %v447
    %v449 = vpop.f32.mrf.mxu0
    %v450 = vadd.f32 0.0, %v449
    %451 = vmatprep.mubr.f32.mxu0 0.0
    %452 = vmatmul.mubr.f32.gmra.mxu0 %v343
    %v453 = vpop.f32.mrf.mxu0
    %v454 = vadd.f32 0.0, %v453
    %v455 = vpop.f32.mrf.mxu0
    %v456 = vadd.f32 0.0, %v455
    %457 = vdwg.mxu0
    %v458 = vmax.f32 %v412, 0.0
    %v459 = vmax.f32 %v414, 0.0
    %v460 = vmax.f32 %v418, 0.0
    %v461 = vmax.f32 %v420, 0.0
    %v462 = vmax.f32 %v424, 0.0
    %v463 = vmax.f32 %v426, 0.0
    %v464 = vmax.f32 %v430, 0.0
    %v465 = vmax.f32 %v432, 0.0
    %v466 = vmax.f32 %v436, 0.0
    %v467 = vmax.f32 %v438, 0.0
    %v468 = vmax.f32 %v442, 0.0
    %v469 = vmax.f32 %v444, 0.0
    %v470 = vmax.f32 %v448, 0.0
    %v471 = vmax.f32 %v450, 0.0
    %v472 = vmax.f32 %v454, 0.0
    %v473 = vmax.f32 %v456, 0.0
    %s474 = sld [smem:[#allocation6]]
    %v475 = vsub.f32 %v118, %v458
    %v476 = vsub.f32 %v119, %v459
    %v477 = vsub.f32 %v120, %v460
    %v478 = vsub.f32 %v121, %v461
    %v479 = vsub.f32 %v122, %v462
    %v480 = vsub.f32 %v123, %v463
    %v481 = vsub.f32 %v124, %v464
    %v482 = vsub.f32 %v125, %v465
    %v483 = vsub.f32 %v126, %v466
    %v484 = vsub.f32 %v127, %v467
    %v485 = vsub.f32 %v128, %v468
    %v486 = vsub.f32 %v129, %v469
    %v487 = vsub.f32 %v130, %v470
    %v488 = vsub.f32 %v131, %v471
    %v489 = vsub.f32 %v132, %v472
    %v490 = vsub.f32 %v133, %v473
    %v491 = vmul.f32 %v475, %v475
    %v492 = vmul.f32 %v476, %v476
    %v493 = vmul.f32 %v477, %v477
    %v494 = vmul.f32 %v478, %v478
    %v495 = vmul.f32 %v479, %v479
    %v496 = vmul.f32 %v480, %v480
    %v497 = vmul.f32 %v481, %v481
    %v498 = vmul.f32 %v482, %v482
    %v499 = vmul.f32 %v483, %v483
    %v500 = vmul.f32 %v484, %v484
    %v501 = vmul.f32 %v485, %v485
    %v502 = vmul.f32 %v486, %v486
    %v503 = vmul.f32 %v487, %v487
    %v504 = vmul.f32 %v488, %v488
    %v505 = vmul.f32 %v489, %v489
    %v506 = vmul.f32 %v490, %v490
    %v507 = vadd.f32 %v491, %v493
    %v508 = vadd.f32 %v507, %v495
    %v509 = vadd.f32 %v508, %v497
    %v510 = vadd.f32 %v509, %v499
    %v511 = vadd.f32 %v510, %v501
    %v512 = vadd.f32 %v511, %v503
    %v513 = vadd.f32 %v512, %v505
    %v514 = vrot.slane %v513, 4
    %v515 = vadd.f32 %v513, %v514
    %v516 = vrot.slane %v515, 2
    %v517 = vadd.f32 %v515, %v516
    %v518 = vrot.slane %v517, 1
    %v519 = vadd.f32 %v517, %v518
    %v520 = vadd.f32 %v492, %v494
    %v521 = vadd.f32 %v520, %v496
    %v522 = vadd.f32 %v521, %v498
    %v523 = vadd.f32 %v522, %v500
    %v524 = vadd.f32 %v523, %v502
    %v525 = vadd.f32 %v524, %v504
    %v526 = vadd.f32 %v525, %v506
    %v527 = vrot.slane %v526, 4
    %v528 = vadd.f32 %v526, %v527
    %v529 = vrot.slane %v528, 2
    %v530 = vadd.f32 %v528, %v529
    %v531 = vrot.slane %v530, 1
    %v532 = vadd.f32 %v530, %v531
    %v533 = vstv %s474
    %v534 = vmul.f32 %v533, %v519
    %v535 = vmul.f32 %v533, %v532
    %v536 = vld [vmem:[%s2 + $0xe0] sm:$0xff]
    %v537 = vld [vmem:[%s2 + $0xe8] sm:$0xff]
    %v538 = vld [vmem:[%s2 + $0xf0] sm:$0xff]
    %v539 = vld [vmem:[%s2 + $0xf8] sm:$0xff]
    %v540 = vld [vmem:[%s2 + $0x100] sm:$0xff]
    %v541 = vld [vmem:[%s2 + $0x108] sm:$0xff]
    %v542 = vld [vmem:[%s2 + $0x110] sm:$0xff]
    %v543 = vld [vmem:[%s2 + $0x118] sm:$0xff]
    %v544 = vld [vmem:[#allocation9] sm:$0xff]
    %v545 = vld [vmem:[#allocation9 + $0x8] sm:$0xff]
    %v546 = vld [vmem:[#allocation9 + $0x10] sm:$0xff]
    %v547 = vld [vmem:[#allocation9 + $0x18] sm:$0xff]
    %v549 = vsel %vm320, %v544, 0
    %v552 = vsel %vm320, %v545, 0
    %v555 = vsel %vm320, %v546, 0
    %v558 = vsel %vm320, %v547, 0
    %560 = vmatprep.subr.mxu0 0.0
    %561 = vmatpush1.msra.mxu0 0.0
    %562 = vmatprep.subr.mxu0 0.0
    %563 = vmatpush1.msra.mxu0 0.0
    %564 = vmatprep.subr.mxu0 0.0
    %565 = vmatpush1.msra.mxu0 0.0
    %566 = vmatprep.subr.mxu0 0.0
    %567 = vmatpush1.msra.mxu0 0.0
    %568 = vmatprep.subr.mxu0 0.0
    %569 = vmatpush1.msra.mxu0 0.0
    %570 = vmatprep.subr.mxu0 0.0
    %571 = vmatpush1.msra.mxu0 0.0
    %572 = vmatprep.subr.mxu0 0.0
    %573 = vmatpush1.msra.mxu0 0.0
    %574 = vmatprep.subr.mxu0 0.0
    %575 = vmatpush1.msra.mxu0 0.0
    %576 = vmatprep.subr.mxu0 0.0
    %577 = vmatpush1.msra.mxu0 0.0
    %578 = vmatprep.subr.mxu0 0.0
    %579 = vmatpush1.msra.mxu0 0.0
    %580 = vmatprep.subr.mxu0 %v311
    %581 = vmatpush1.msra.mxu0 %v310
    %582 = vmatprep.subr.mxu0 %v309
    %583 = vmatpush1.msra.mxu0 %v308
    %584 = vmatprep.subr.mxu0 %v307
    %585 = vmatpush1.msra.mxu0 %v306
    %586 = vmatprep.subr.mxu0 %v305
    %587 = vmatpush1.msra.mxu0 %v304
    %588 = vmatprep.subr.mxu0 %v303
    %589 = vmatpush1.msra.mxu0 %v302
    %590 = vmatprep.subr.mxu0 %v301
    %591 = vmatpush1.msra.mxu0 %v300
    %592 = vmatprep.subr.mxu0 0.0
    %593 = vmatpush2.msra.mxu0 0.0
    %594 = vmatprep.subr.mxu0 0.0
    %595 = vmatpush2.msra.mxu0 0.0
    %596 = vmatprep.subr.mxu0 0.0
    %597 = vmatpush2.msra.mxu0 0.0
    %598 = vmatprep.subr.mxu0 0.0
    %599 = vmatpush2.msra.mxu0 0.0
    %600 = vmatprep.subr.mxu0 0.0
    %601 = vmatpush2.msra.mxu0 0.0
    %602 = vmatprep.subr.mxu0 0.0
    %603 = vmatpush2.msra.mxu0 0.0
    %604 = vmatprep.subr.mxu0 0.0
    %605 = vmatpush2.msra.mxu0 0.0
    %606 = vmatprep.subr.mxu0 0.0
    %607 = vmatpush2.msra.mxu0 0.0
    %608 = vmatprep.subr.mxu0 0.0
    %609 = vmatpush2.msra.mxu0 0.0
    %610 = vmatprep.subr.mxu0 0.0
    %611 = vmatpush2.msra.mxu0 0.0
    %612 = vmatprep.subr.mxu0 0.0
    %613 = vmatpush2.msra.mxu0 0.0
    %614 = vmatprep.subr.mxu0 0.0
    %615 = vmatpush2.msra.mxu0 0.0
    %616 = vmatprep.subr.mxu0 0.0
    %617 = vmatpush2.msra.mxu0 0.0
    %618 = vmatprep.subr.mxu0 0.0
    %619 = vmatpush2.msra.mxu0 0.0
    %620 = vmatprep.subr.mxu0 0.0
    %621 = vmatpush2.msra.mxu0 0.0
    %622 = vmatprep.subr.mxu0 0.0
    %623 = vmatpush2.msra.mxu0 0.0
    %624 = vmatprep.mubr.f32.mxu0 0.0
    %625 = vmatmul.mubr.f32.gmra.mxu0 %v549
    %v626 = vpop.f32.mrf.mxu0
    %v627 = vadd.f32 0.0, %v626
    %v628 = vpop.f32.mrf.mxu0
    %v629 = vadd.f32 0.0, %v628
    %630 = vmatprep.mubr.f32.mxu0 0.0
    %631 = vmatmul.mubr.f32.gmra.mxu0 %v552
    %v632 = vpop.f32.mrf.mxu0
    %v633 = vadd.f32 0.0, %v632
    %v634 = vpop.f32.mrf.mxu0
    %v635 = vadd.f32 0.0, %v634
    %636 = vmatprep.mubr.f32.mxu0 0.0
    %637 = vmatmul.mubr.f32.gmra.mxu0 %v555
    %v638 = vpop.f32.mrf.mxu0
    %v639 = vadd.f32 0.0, %v638
    %v640 = vpop.f32.mrf.mxu0
    %v641 = vadd.f32 0.0, %v640
    %642 = vmatprep.mubr.f32.mxu0 0.0
    %643 = vmatmul.mubr.f32.gmra.mxu0 %v558
    %v644 = vpop.f32.mrf.mxu0
    %v645 = vadd.f32 0.0, %v644
    %v646 = vpop.f32.mrf.mxu0
    %v647 = vadd.f32 0.0, %v646
    %648 = vdwg.mxu0
    %s649 = sld [smem:[#allocation2 + $0x80]]
    %v650 = vstv %s649
    %v651 = vmul.f32 %v650, %v627
    %v652 = vmul.f32 %v650, %v629
    %v653 = vmul.f32 %v650, %v633
    %v654 = vmul.f32 %v650, %v635
    %v655 = vmul.f32 %v650, %v639
    %v656 = vmul.f32 %v650, %v641
    %v657 = vmul.f32 %v650, %v645
    %v658 = vmul.f32 %v650, %v647
    %s659 = sld [smem:[#allocation2 + $0x81]]
    %v660 = vstv %s659
    %v661 = vmul.f32 %v660, %v536
    %v662 = vmul.f32 %v660, %v537
    %v663 = vmul.f32 %v660, %v538
    %v664 = vmul.f32 %v660, %v539
    %v665 = vmul.f32 %v660, %v540
    %v666 = vmul.f32 %v660, %v541
    %v667 = vmul.f32 %v660, %v542
    %v668 = vmul.f32 %v660, %v543
    %v669 = vadd.f32 %v651, %v661
    %v670 = vadd.f32 %v652, %v662
    %v671 = vadd.f32 %v653, %v663
    %v672 = vadd.f32 %v654, %v664
    %v673 = vadd.f32 %v655, %v665
    %v674 = vadd.f32 %v656, %v666
    %v675 = vadd.f32 %v657, %v667
    %v676 = vadd.f32 %v658, %v668
    %v677 = vld [vmem:[%s4] sm:$0xff]
    %v678 = vld [vmem:[%s4 + $0x8] sm:$0xff]
    %v679 = vld [vmem:[%s4 + $0x10] sm:$0xff]
    %v680 = vld [vmem:[%s4 + $0x18] sm:$0xff]
    %v681 = vld [vmem:[%s4 + $0x20] sm:$0xff]
    %v682 = vld [vmem:[%s4 + $0x28] sm:$0xff]
    %vm683 = vcmask 261120
    %v685 = vsel %vm683, %v677, 0
    %v688 = vsel %vm683, %v678, 0
    %v691 = vsel %vm683, %v679, 0
    %v694 = vsel %vm683, %v680, 0
    %v697 = vsel %vm683, %v681, 0
    %v700 = vsel %vm683, %v682, 0
    %702 = vmatprep.subr.mxu0 0.0
    %703 = vmatpush1.msra.mxu0 0.0
    %704 = vmatprep.subr.mxu0 0.0
    %705 = vmatpush1.msra.mxu0 0.0
    %706 = vmatprep.subr.mxu0 0.0
    %707 = vmatpush1.msra.mxu0 0.0
    %708 = vmatprep.subr.mxu0 0.0
    %709 = vmatpush1.msra.mxu0 0.0
    %710 = vmatprep.subr.mxu0 0.0
    %711 = vmatpush1.msra.mxu0 0.0
    %712 = vmatprep.subr.mxu0 0.0
    %713 = vmatpush1.msra.mxu0 0.0
    %714 = vmatprep.subr.mxu0 0.0
    %715 = vmatpush1.msra.mxu0 0.0
    %716 = vmatprep.subr.mxu0 0.0
    %717 = vmatpush1.msra.mxu0 0.0
    %718 = vmatprep.subr.mxu0 0.0
    %719 = vmatpush1.msra.mxu0 0.0
    %720 = vmatprep.subr.mxu0 0.0
    %721 = vmatpush1.msra.mxu0 0.0
    %722 = vmatprep.subr.mxu0 0.0
    %723 = vmatpush1.msra.mxu0 0.0
    %724 = vmatprep.subr.mxu0 0.0
    %725 = vmatpush1.msra.mxu0 0.0
    %726 = vmatprep.subr.mxu0 %v676
    %727 = vmatpush1.msra.mxu0 %v675
    %728 = vmatprep.subr.mxu0 %v674
    %729 = vmatpush1.msra.mxu0 %v673
    %730 = vmatprep.subr.mxu0 %v672
    %731 = vmatpush1.msra.mxu0 %v671
    %732 = vmatprep.subr.mxu0 %v670
    %733 = vmatpush1.msra.mxu0 %v669
    %734 = vmatprep.subr.mxu0 0.0
    %735 = vmatpush2.msra.mxu0 0.0
    %736 = vmatprep.subr.mxu0 0.0
    %737 = vmatpush2.msra.mxu0 0.0
    %738 = vmatprep.subr.mxu0 0.0
    %739 = vmatpush2.msra.mxu0 0.0
    %740 = vmatprep.subr.mxu0 0.0
    %741 = vmatpush2.msra.mxu0 0.0
    %742 = vmatprep.subr.mxu0 0.0
    %743 = vmatpush2.msra.mxu0 0.0
    %744 = vmatprep.subr.mxu0 0.0
    %745 = vmatpush2.msra.mxu0 0.0
    %746 = vmatprep.subr.mxu0 0.0
    %747 = vmatpush2.msra.mxu0 0.0
    %748 = vmatprep.subr.mxu0 0.0
    %749 = vmatpush2.msra.mxu0 0.0
    %750 = vmatprep.subr.mxu0 0.0
    %751 = vmatpush2.msra.mxu0 0.0
    %752 = vmatprep.subr.mxu0 0.0
    %753 = vmatpush2.msra.mxu0 0.0
    %754 = vmatprep.subr.mxu0 0.0
    %755 = vmatpush2.msra.mxu0 0.0
    %756 = vmatprep.subr.mxu0 0.0
    %757 = vmatpush2.msra.mxu0 0.0
    %758 = vmatprep.subr.mxu0 0.0
    %759 = vmatpush2.msra.mxu0 0.0
    %760 = vmatprep.subr.mxu0 0.0
    %761 = vmatpush2.msra.mxu0 0.0
    %762 = vmatprep.subr.mxu0 0.0
    %763 = vmatpush2.msra.mxu0 0.0
    %764 = vmatprep.subr.mxu0 0.0
    %765 = vmatpush2.msra.mxu0 0.0
    %766 = vmatprep.mubr.f32.mxu0 0.0
    %767 = vmatmul.mubr.f32.gmra.mxu0 %v685
    %v768 = vpop.f32.mrf.mxu0
    %v769 = vadd.f32 0.0, %v768
    %v770 = vpop.f32.mrf.mxu0
    %v771 = vadd.f32 0.0, %v770
    %772 = vmatprep.mubr.f32.mxu0 0.0
    %773 = vmatmul.mubr.f32.gmra.mxu0 %v688
    %v774 = vpop.f32.mrf.mxu0
    %v775 = vadd.f32 0.0, %v774
    %v776 = vpop.f32.mrf.mxu0
    %v777 = vadd.f32 0.0, %v776
    %778 = vmatprep.mubr.f32.mxu0 0.0
    %779 = vmatmul.mubr.f32.gmra.mxu0 %v691
    %v780 = vpop.f32.mrf.mxu0
    %v781 = vadd.f32 0.0, %v780
    %v782 = vpop.f32.mrf.mxu0
    %v783 = vadd.f32 0.0, %v782
    %784 = vmatprep.mubr.f32.mxu0 0.0
    %785 = vmatmul.mubr.f32.gmra.mxu0 %v694
    %v786 = vpop.f32.mrf.mxu0
    %v787 = vadd.f32 0.0, %v786
    %v788 = vpop.f32.mrf.mxu0
    %v789 = vadd.f32 0.0, %v788
    %790 = vmatprep.mubr.f32.mxu0 0.0
    %791 = vmatmul.mubr.f32.gmra.mxu0 %v697
    %v792 = vpop.f32.mrf.mxu0
    %v793 = vadd.f32 0.0, %v792
    %v794 = vpop.f32.mrf.mxu0
    %v795 = vadd.f32 0.0, %v794
    %796 = vmatprep.mubr.f32.mxu0 0.0
    %797 = vmatmul.mubr.f32.gmra.mxu0 %v700
    %v798 = vpop.f32.mrf.mxu0
    %v799 = vadd.f32 0.0, %v798
    %v800 = vpop.f32.mrf.mxu0
    %v801 = vadd.f32 0.0, %v800
    %802 = vdwg.mxu0
    %v803 = vmax.f32 %v769, 0.0
    %v804 = vmax.f32 %v771, 0.0
    %v805 = vmax.f32 %v775, 0.0
    %v806 = vmax.f32 %v777, 0.0
    %v807 = vmax.f32 %v781, 0.0
    %v808 = vmax.f32 %v783, 0.0
    %v809 = vmax.f32 %v787, 0.0
    %v810 = vmax.f32 %v789, 0.0
    %v811 = vmax.f32 %v793, 0.0
    %v812 = vmax.f32 %v795, 0.0
    %v813 = vmax.f32 %v799, 0.0
    %v814 = vmax.f32 %v801, 0.0
    %v815 = vsub.f32 %v803, %v238
    %v816 = vsub.f32 %v804, %v240
    %v817 = vsub.f32 %v805, %v244
    %v818 = vsub.f32 %v806, %v246
    %v819 = vsub.f32 %v807, %v250
    %v820 = vsub.f32 %v808, %v252
    %v821 = vsub.f32 %v809, %v256
    %v822 = vsub.f32 %v810, %v258
    %v823 = vsub.f32 %v811, %v262
    %v824 = vsub.f32 %v812, %v264
    %v825 = vsub.f32 %v813, %v268
    %v826 = vsub.f32 %v814, %v270
    %827 = vmatprep.subr.mxu0 0.0
    %828 = vmatpush1.msra.mxu0 0.0
    %829 = vmatprep.subr.mxu0 0.0
    %830 = vmatpush1.msra.mxu0 0.0
    %831 = vmatprep.subr.mxu0 0.0
    %832 = vmatpush1.msra.mxu0 0.0
    %833 = vmatprep.subr.mxu0 0.0
    %834 = vmatpush1.msra.mxu0 0.0
    %835 = vmatprep.subr.mxu0 0.0
    %836 = vmatpush1.msra.mxu0 0.0
    %837 = vmatprep.subr.mxu0 0.0
    %838 = vmatpush1.msra.mxu0 0.0
    %839 = vmatprep.subr.mxu0 0.0
    %840 = vmatpush1.msra.mxu0 0.0
    %841 = vmatprep.subr.mxu0 0.0
    %842 = vmatpush1.msra.mxu0 0.0
    %843 = vmatprep.subr.mxu0 0.0
    %844 = vmatpush1.msra.mxu0 0.0
    %845 = vmatprep.subr.mxu0 0.0
    %846 = vmatpush1.msra.mxu0 0.0
    %847 = vmatprep.subr.mxu0 %v826
    %848 = vmatpush1.msra.mxu0 %v825
    %849 = vmatprep.subr.mxu0 %v824
    %850 = vmatpush1.msra.mxu0 %v823
    %851 = vmatprep.subr.mxu0 %v822
    %852 = vmatpush1.msra.mxu0 %v821
    %853 = vmatprep.subr.mxu0 %v820
    %854 = vmatpush1.msra.mxu0 %v819
    %855 = vmatprep.subr.mxu0 %v818
    %856 = vmatpush1.msra.mxu0 %v817
    %857 = vmatprep.subr.mxu0 %v816
    %858 = vmatpush1.msra.mxu0 %v815
    %859 = vmatprep.subr.mxu0 0.0
    %860 = vmatpush2.msra.mxu0 0.0
    %861 = vmatprep.subr.mxu0 0.0
    %862 = vmatpush2.msra.mxu0 0.0
    %863 = vmatprep.subr.mxu0 0.0
    %864 = vmatpush2.msra.mxu0 0.0
    %865 = vmatprep.subr.mxu0 0.0
    %866 = vmatpush2.msra.mxu0 0.0
    %867 = vmatprep.subr.mxu0 0.0
    %868 = vmatpush2.msra.mxu0 0.0
    %869 = vmatprep.subr.mxu0 0.0
    %870 = vmatpush2.msra.mxu0 0.0
    %871 = vmatprep.subr.mxu0 0.0
    %872 = vmatpush2.msra.mxu0 0.0
    %873 = vmatprep.subr.mxu0 0.0
    %874 = vmatpush2.msra.mxu0 0.0
    %875 = vmatprep.subr.mxu0 0.0
    %876 = vmatpush2.msra.mxu0 0.0
    %877 = vmatprep.subr.mxu0 0.0
    %878 = vmatpush2.msra.mxu0 0.0
    %879 = vmatprep.subr.mxu0 0.0
    %880 = vmatpush2.msra.mxu0 0.0
    %881 = vmatprep.subr.mxu0 0.0
    %882 = vmatpush2.msra.mxu0 0.0
    %883 = vmatprep.subr.mxu0 0.0
    %884 = vmatpush2.msra.mxu0 0.0
    %885 = vmatprep.subr.mxu0 0.0
    %886 = vmatpush2.msra.mxu0 0.0
    %887 = vmatprep.subr.mxu0 0.0
    %888 = vmatpush2.msra.mxu0 0.0
    %889 = vmatprep.subr.mxu0 0.0
    %890 = vmatpush2.msra.mxu0 0.0
    %891 = vmatprep.mubr.f32.mxu0 0.0
    %892 = vmatmul.mubr.f32.gmra.mxu0 %v549
    %v893 = vpop.f32.mrf.mxu0
    %v894 = vadd.f32 0.0, %v893
    %v895 = vpop.f32.mrf.mxu0
    %v896 = vadd.f32 0.0, %v895
    %897 = vmatprep.mubr.f32.mxu0 0.0
    %898 = vmatmul.mubr.f32.gmra.mxu0 %v552
    %v899 = vpop.f32.mrf.mxu0
    %v900 = vadd.f32 0.0, %v899
    %v901 = vpop.f32.mrf.mxu0
    %v902 = vadd.f32 0.0, %v901
    %903 = vmatprep.mubr.f32.mxu0 0.0
    %904 = vmatmul.mubr.f32.gmra.mxu0 %v555
    %v905 = vpop.f32.mrf.mxu0
    %v906 = vadd.f32 0.0, %v905
    %v907 = vpop.f32.mrf.mxu0
    %v908 = vadd.f32 0.0, %v907
    %909 = vmatprep.mubr.f32.mxu0 0.0
    %910 = vmatmul.mubr.f32.gmra.mxu0 %v558
    %v911 = vpop.f32.mrf.mxu0
    %v912 = vadd.f32 0.0, %v911
    %v913 = vpop.f32.mrf.mxu0
    %v914 = vadd.f32 0.0, %v913
    %915 = vdwg.mxu0
    %v916 = vld [vmem:[#allocation11] sm:$0xff]
    %v917 = vld [vmem:[#allocation11 + $0x8] sm:$0xff]
    %v918 = vld [vmem:[#allocation11 + $0x10] sm:$0xff]
    %v919 = vld [vmem:[#allocation11 + $0x18] sm:$0xff]
    %v921 = vsel %vm683, %v916, 0
    %v924 = vsel %vm683, %v917, 0
    %v927 = vsel %vm683, %v918, 0
    %v930 = vsel %vm683, %v919, 0
    %932 = vmatprep.subr.mxu0 0.0
    %933 = vmatpush1.msra.mxu0 0.0
    %934 = vmatprep.subr.mxu0 0.0
    %935 = vmatpush1.msra.mxu0 0.0
    %936 = vmatprep.subr.mxu0 0.0
    %937 = vmatpush1.msra.mxu0 0.0
    %938 = vmatprep.subr.mxu0 0.0
    %939 = vmatpush1.msra.mxu0 0.0
    %940 = vmatprep.subr.mxu0 0.0
    %941 = vmatpush1.msra.mxu0 0.0
    %942 = vmatprep.subr.mxu0 0.0
    %943 = vmatpush1.msra.mxu0 0.0
    %944 = vmatprep.subr.mxu0 0.0
    %945 = vmatpush1.msra.mxu0 0.0
    %946 = vmatprep.subr.mxu0 0.0
    %947 = vmatpush1.msra.mxu0 0.0
    %948 = vmatprep.subr.mxu0 0.0
    %949 = vmatpush1.msra.mxu0 0.0
    %950 = vmatprep.subr.mxu0 0.0
    %951 = vmatpush1.msra.mxu0 0.0
    %952 = vmatprep.subr.mxu0 0.0
    %953 = vmatpush1.msra.mxu0 0.0
    %954 = vmatprep.subr.mxu0 0.0
    %955 = vmatpush1.msra.mxu0 0.0
    %956 = vmatprep.subr.mxu0 %v914
    %957 = vmatpush1.msra.mxu0 %v912
    %958 = vmatprep.subr.mxu0 %v908
    %959 = vmatpush1.msra.mxu0 %v906
    %960 = vmatprep.subr.mxu0 %v902
    %961 = vmatpush1.msra.mxu0 %v900
    %962 = vmatprep.subr.mxu0 %v896
    %963 = vmatpush1.msra.mxu0 %v894
    %964 = vmatprep.subr.mxu0 0.0
    %965 = vmatpush2.msra.mxu0 0.0
    %966 = vmatprep.subr.mxu0 0.0
    %967 = vmatpush2.msra.mxu0 0.0
    %968 = vmatprep.subr.mxu0 0.0
    %969 = vmatpush2.msra.mxu0 0.0
    %970 = vmatprep.subr.mxu0 0.0
    %971 = vmatpush2.msra.mxu0 0.0
    %972 = vmatprep.subr.mxu0 0.0
    %973 = vmatpush2.msra.mxu0 0.0
    %974 = vmatprep.subr.mxu0 0.0
    %975 = vmatpush2.msra.mxu0 0.0
    %976 = vmatprep.subr.mxu0 0.0
    %977 = vmatpush2.msra.mxu0 0.0
    %978 = vmatprep.subr.mxu0 0.0
    %979 = vmatpush2.msra.mxu0 0.0
    %980 = vmatprep.subr.mxu0 0.0
    %981 = vmatpush2.msra.mxu0 0.0
    %982 = vmatprep.subr.mxu0 0.0
    %983 = vmatpush2.msra.mxu0 0.0
    %984 = vmatprep.subr.mxu0 0.0
    %985 = vmatpush2.msra.mxu0 0.0
    %986 = vmatprep.subr.mxu0 0.0
    %987 = vmatpush2.msra.mxu0 0.0
    %988 = vmatprep.subr.mxu0 0.0
    %989 = vmatpush2.msra.mxu0 0.0
    %990 = vmatprep.subr.mxu0 0.0
    %991 = vmatpush2.msra.mxu0 0.0
    %992 = vmatprep.subr.mxu0 0.0
    %993 = vmatpush2.msra.mxu0 0.0
    %994 = vmatprep.subr.mxu0 0.0
    %995 = vmatpush2.msra.mxu0 0.0
    %996 = vmatprep.mubr.f32.mxu0 0.0
    %997 = vmatmul.mubr.f32.gmra.mxu0 %v921
    %v998 = vpop.f32.mrf.mxu0
    %v999 = vadd.f32 0.0, %v998
    %v1000 = vpop.f32.mrf.mxu0
    %v1001 = vadd.f32 0.0, %v1000
    %1002 = vmatprep.mubr.f32.mxu0 0.0
    %1003 = vmatmul.mubr.f32.gmra.mxu0 %v924
    %v1004 = vpop.f32.mrf.mxu0
    %v1005 = vadd.f32 0.0, %v1004
    %v1006 = vpop.f32.mrf.mxu0
    %v1007 = vadd.f32 0.0, %v1006
    %1008 = vmatprep.mubr.f32.mxu0 0.0
    %1009 = vmatmul.mubr.f32.gmra.mxu0 %v927
    %v1010 = vpop.f32.mrf.mxu0
    %v1011 = vadd.f32 0.0, %v1010
    %v1012 = vpop.f32.mrf.mxu0
    %v1013 = vadd.f32 0.0, %v1012
    %1014 = vmatprep.mubr.f32.mxu0 0.0
    %1015 = vmatmul.mubr.f32.gmra.mxu0 %v930
    %v1016 = vpop.f32.mrf.mxu0
    %v1017 = vadd.f32 0.0, %v1016
    %v1018 = vpop.f32.mrf.mxu0
    %v1019 = vadd.f32 0.0, %v1018
    %1020 = vdwg.mxu0
    %s1021 = sld [smem:[#allocation2 + $0x82]]
    %v1022 = vmul.f32 %v815, %v815
    %v1023 = vmul.f32 %v816, %v816
    %v1024 = vmul.f32 %v817, %v817
    %v1025 = vmul.f32 %v818, %v818
    %v1026 = vmul.f32 %v819, %v819
    %v1027 = vmul.f32 %v820, %v820
    %v1028 = vmul.f32 %v821, %v821
    %v1029 = vmul.f32 %v822, %v822
    %v1030 = vmul.f32 %v823, %v823
    %v1031 = vmul.f32 %v824, %v824
    %v1032 = vmul.f32 %v825, %v825
    %v1033 = vmul.f32 %v826, %v826
    %v1034 = vadd.f32 %v1022, %v1024
    %v1035 = vadd.f32 %v1034, %v1026
    %v1036 = vadd.f32 %v1035, %v1028
    %v1037 = vadd.f32 %v1036, %v1030
    %v1038 = vadd.f32 %v1037, %v1032
    %v1039 = vrot.slane %v1038, 4
    %v1040 = vadd.f32 %v1038, %v1039
    %v1041 = vrot.slane %v1040, 2
    %v1042 = vadd.f32 %v1040, %v1041
    %v1043 = vrot.slane %v1042, 1
    %v1044 = vadd.f32 %v1042, %v1043
    %v1045 = vadd.f32 %v1023, %v1025
    %v1046 = vadd.f32 %v1045, %v1027
    %v1047 = vadd.f32 %v1046, %v1029
    %v1048 = vadd.f32 %v1047, %v1031
    %v1049 = vadd.f32 %v1048, %v1033
    %v1050 = vrot.slane %v1049, 4
    %v1051 = vadd.f32 %v1049, %v1050
    %v1052 = vrot.slane %v1051, 2
    %v1053 = vadd.f32 %v1051, %v1052
    %v1054 = vrot.slane %v1053, 1
    %v1055 = vadd.f32 %v1053, %v1054
    %v1056 = vstv %s1021
    %v1057 = vmul.f32 %v1056, %v1044
    %v1058 = vmul.f32 %v1056, %v1055
    %s1059 = sld [smem:[#allocation2 + $0x83]]
    %v1060 = vmul.f32 %v894, %v894
    %v1061 = vmul.f32 %v896, %v896
    %v1062 = vmul.f32 %v900, %v900
    %v1063 = vmul.f32 %v902, %v902
    %v1064 = vmul.f32 %v906, %v906
    %v1065 = vmul.f32 %v908, %v908
    %v1066 = vmul.f32 %v912, %v912
    %v1067 = vmul.f32 %v914, %v914
    %v1068 = vadd.f32 %v1060, %v1062
    %v1069 = vadd.f32 %v1068, %v1064
    %v1070 = vadd.f32 %v1069, %v1066
    %v1071 = vrot.slane %v1070, 4
    %v1072 = vadd.f32 %v1070, %v1071
    %v1073 = vrot.slane %v1072, 2
    %v1074 = vadd.f32 %v1072, %v1073
    %v1075 = vrot.slane %v1074, 1
    %v1076 = vadd.f32 %v1074, %v1075
    %v1077 = vadd.f32 %v1061, %v1063
    %v1078 = vadd.f32 %v1077, %v1065
    %v1079 = vadd.f32 %v1078, %v1067
    %v1080 = vrot.slane %v1079, 4
    %v1081 = vadd.f32 %v1079, %v1080
    %v1082 = vrot.slane %v1081, 2
    %v1083 = vadd.f32 %v1081, %v1082
    %v1084 = vrot.slane %v1083, 1
    %v1085 = vadd.f32 %v1083, %v1084
    %v1086 = vstv %s1059
    %v1087 = vmul.f32 %v1086, %v1076
    %v1088 = vmul.f32 %v1086, %v1085
    %v1089 = vadd.f32 %v1057, %v1087
    %v1090 = vadd.f32 %v1058, %v1088
    %s1091 = sld [smem:[#allocation2 + $0x84]]
    %v1092 = vmul.f32 %v894, %v999
    %v1093 = vmul.f32 %v896, %v1001
    %v1094 = vmul.f32 %v900, %v1005
    %v1095 = vmul.f32 %v902, %v1007
    %v1096 = vmul.f32 %v906, %v1011
    %v1097 = vmul.f32 %v908, %v1013
    %v1098 = vmul.f32 %v912, %v1017
    %v1099 = vmul.f32 %v914, %v1019
    %v1100 = vadd.f32 %v1092, %v1094
    %v1101 = vadd.f32 %v1100, %v1096
    %v1102 = vadd.f32 %v1101, %v1098
    %v1103 = vrot.slane %v1102, 4
    %v1104 = vadd.f32 %v1102, %v1103
    %v1105 = vrot.slane %v1104, 2
    %v1106 = vadd.f32 %v1104, %v1105
    %v1107 = vrot.slane %v1106, 1
    %v1108 = vadd.f32 %v1106, %v1107
    %v1109 = vadd.f32 %v1093, %v1095
    %v1110 = vadd.f32 %v1109, %v1097
    %v1111 = vadd.f32 %v1110, %v1099
    %v1112 = vrot.slane %v1111, 4
    %v1113 = vadd.f32 %v1111, %v1112
    %v1114 = vrot.slane %v1113, 2
    %v1115 = vadd.f32 %v1113, %v1114
    %v1116 = vrot.slane %v1115, 1
    %v1117 = vadd.f32 %v1115, %v1116
    %v1118 = vstv %s1091
    %v1119 = vmul.f32 %v1118, %v1108
    %v1120 = vmul.f32 %v1118, %v1117
    %v1121 = vadd.f32 %v1089, %v1119
    %v1122 = vadd.f32 %v1090, %v1120
    %s1123 = sld [smem:[#allocation2 + $0x85]]
    %v1124 = vmul.f32 %v999, %v999
    %v1125 = vmul.f32 %v1001, %v1001
    %v1126 = vmul.f32 %v1005, %v1005
    %v1127 = vmul.f32 %v1007, %v1007
    %v1128 = vmul.f32 %v1011, %v1011
    %v1129 = vmul.f32 %v1013, %v1013
    %v1130 = vmul.f32 %v1017, %v1017
    %v1131 = vmul.f32 %v1019, %v1019
    %v1132 = vadd.f32 %v1124, %v1126
    %v1133 = vadd.f32 %v1132, %v1128
    %v1134 = vadd.f32 %v1133, %v1130
    %v1135 = vrot.slane %v1134, 4
    %v1136 = vadd.f32 %v1134, %v1135
    %v1137 = vrot.slane %v1136, 2
    %v1138 = vadd.f32 %v1136, %v1137
    %v1139 = vrot.slane %v1138, 1
    %v1140 = vadd.f32 %v1138, %v1139
    %v1141 = vadd.f32 %v1125, %v1127
    %v1142 = vadd.f32 %v1141, %v1129
    %v1143 = vadd.f32 %v1142, %v1131
    %v1144 = vrot.slane %v1143, 4
    %v1145 = vadd.f32 %v1143, %v1144
    %v1146 = vrot.slane %v1145, 2
    %v1147 = vadd.f32 %v1145, %v1146
    %v1148 = vrot.slane %v1147, 1
    %v1149 = vadd.f32 %v1147, %v1148
    %v1150 = vstv %s1123
    %v1151 = vmul.f32 %v1150, %v1140
    %v1152 = vmul.f32 %v1150, %v1149
    %v1153 = vadd.f32 %v1121, %v1151
    %v1154 = vadd.f32 %v1122, %v1152
    %v1155 = vadd.f32 %v534, %v1153
    %v1156 = vadd.f32 %v535, %v1154
    %v1157 = vld [vmem:[#allocation12] sm:$0xff]
    %v1158 = vld [vmem:[#allocation12 + $0x8] sm:$0xff]
    %v1160 = vsel %vm683, %v1157, 0
    %v1163 = vsel %vm683, %v1158, 0
    %1165 = vmatprep.subr.mxu0 0.0
    %1166 = vmatpush1.msra.mxu0 0.0
    %1167 = vmatprep.subr.mxu0 0.0
    %1168 = vmatpush1.msra.mxu0 0.0
    %1169 = vmatprep.subr.mxu0 0.0
    %1170 = vmatpush1.msra.mxu0 0.0
    %1171 = vmatprep.subr.mxu0 0.0
    %1172 = vmatpush1.msra.mxu0 0.0
    %1173 = vmatprep.subr.mxu0 0.0
    %1174 = vmatpush1.msra.mxu0 0.0
    %1175 = vmatprep.subr.mxu0 0.0
    %1176 = vmatpush1.msra.mxu0 0.0
    %1177 = vmatprep.subr.mxu0 0.0
    %1178 = vmatpush1.msra.mxu0 0.0
    %1179 = vmatprep.subr.mxu0 0.0
    %1180 = vmatpush1.msra.mxu0 0.0
    %1181 = vmatprep.subr.mxu0 0.0
    %1182 = vmatpush1.msra.mxu0 0.0
    %1183 = vmatprep.subr.mxu0 0.0
    %1184 = vmatpush1.msra.mxu0 0.0
    %1185 = vmatprep.subr.mxu0 0.0
    %1186 = vmatpush1.msra.mxu0 0.0
    %1187 = vmatprep.subr.mxu0 0.0
    %1188 = vmatpush1.msra.mxu0 0.0
    %1189 = vmatprep.subr.mxu0 %v676
    %1190 = vmatpush1.msra.mxu0 %v675
    %1191 = vmatprep.subr.mxu0 %v674
    %1192 = vmatpush1.msra.mxu0 %v673
    %1193 = vmatprep.subr.mxu0 %v672
    %1194 = vmatpush1.msra.mxu0 %v671
    %1195 = vmatprep.subr.mxu0 %v670
    %1196 = vmatpush1.msra.mxu0 %v669
    %1197 = vmatprep.subr.mxu0 0.0
    %1198 = vmatpush2.msra.mxu0 0.0
    %1199 = vmatprep.subr.mxu0 0.0
    %1200 = vmatpush2.msra.mxu0 0.0
    %1201 = vmatprep.subr.mxu0 0.0
    %1202 = vmatpush2.msra.mxu0 0.0
    %1203 = vmatprep.subr.mxu0 0.0
    %1204 = vmatpush2.msra.mxu0 0.0
    %1205 = vmatprep.subr.mxu0 0.0
    %1206 = vmatpush2.msra.mxu0 0.0
    %1207 = vmatprep.subr.mxu0 0.0
    %1208 = vmatpush2.msra.mxu0 0.0
    %1209 = vmatprep.subr.mxu0 0.0
    %1210 = vmatpush2.msra.mxu0 0.0
    %1211 = vmatprep.subr.mxu0 0.0
    %1212 = vmatpush2.msra.mxu0 0.0
    %1213 = vmatprep.subr.mxu0 0.0
    %1214 = vmatpush2.msra.mxu0 0.0
    %1215 = vmatprep.subr.mxu0 0.0
    %1216 = vmatpush2.msra.mxu0 0.0
    %1217 = vmatprep.subr.mxu0 0.0
    %1218 = vmatpush2.msra.mxu0 0.0
    %1219 = vmatprep.subr.mxu0 0.0
    %1220 = vmatpush2.msra.mxu0 0.0
    %1221 = vmatprep.subr.mxu0 0.0
    %1222 = vmatpush2.msra.mxu0 0.0
    %1223 = vmatprep.subr.mxu0 0.0
    %1224 = vmatpush2.msra.mxu0 0.0
    %1225 = vmatprep.subr.mxu0 0.0
    %1226 = vmatpush2.msra.mxu0 0.0
    %1227 = vmatprep.subr.mxu0 0.0
    %1228 = vmatpush2.msra.mxu0 0.0
    %1229 = vmatprep.mubr.f32.mxu0 0.0
    %1230 = vmatmul.mubr.f32.gmra.mxu0 %v1160
    %v1231 = vpop.f32.mrf.mxu0
    %v1232 = vadd.f32 0.0, %v1231
    %v1233 = vpop.f32.mrf.mxu0
    %v1234 = vadd.f32 0.0, %v1233
    %1235 = vmatprep.mubr.f32.mxu0 0.0
    %1236 = vmatmul.mubr.f32.gmra.mxu0 %v1163
    %v1237 = vpop.f32.mrf.mxu0
    %v1238 = vadd.f32 0.0, %v1237
    %v1239 = vpop.f32.mrf.mxu0
    %v1240 = vadd.f32 0.0, %v1239
    %1241 = vdwg.mxu0
    %v1242 = vmul.f32 %v1232, 1.442695
    %v1243 = vpow.pop %v1242
    %v1244 = vmul.f32 %v1234, 1.442695
    %v1245 = vpow.pop %v1244
    %v1246 = vmul.f32 %v1238, 1.442695
    %v1247 = vpow.pop %v1246
    %v1248 = vmul.f32 %v1240, 1.442695
    %v1249 = vpow.pop %v1248
    %1250 = vst [vmem:[#allocation15] sm:$0xff] %v1243
    %1251 = vst [vmem:[#allocation15 + $0x8] sm:$0xff] %v1245
    %1252 = vst [vmem:[#allocation15 + $0x10] sm:$0xff] %v1247
    %1253 = vst [vmem:[#allocation15 + $0x18] sm:$0xff] %v1249
    %v1254 = vadd.f32 %v1243, %v1247
    %v1255 = vrot.slane %v1254, 4
    %v1256 = vadd.f32 %v1254, %v1255
    %v1257 = vrot.slane %v1256, 2
    %v1258 = vadd.f32 %v1256, %v1257
    %v1259 = vrot.slane %v1258, 1
    %v1260 = vadd.f32 %v1258, %v1259
    %v1261 = vadd.f32 %v1245, %v1249
    %v1262 = vrot.slane %v1261, 4
    %v1263 = vadd.f32 %v1261, %v1262
    %v1264 = vrot.slane %v1263, 2
    %v1265 = vadd.f32 %v1263, %v1264
    %v1266 = vrot.slane %v1265, 1
    %v1267 = vadd.f32 %v1265, %v1266
    %v1268 = vrcp.pop %v1260
    %v1269 = vrcp.pop %v1267
    %v1270 = vmul.f32 %v1243, %v1268
    %v1271 = vmul.f32 %v1245, %v1269
    %v1272 = vmul.f32 %v1247, %v1268
    %v1273 = vmul.f32 %v1249, %v1269
    %v1274 = vadd.f32 %v1260, 1.0
    %v1275 = vadd.f32 %v1267, 1.0
    %v1276 = vrcp.pop %v1274
    %v1277 = vrcp.pop %v1275
    %v1278 = vmul.f32 %v1270, %v1276
    %v1279 = vmul.f32 %v1271, %v1277
    %v1280 = vmul.f32 %v1272, %v1276
    %v1281 = vmul.f32 %v1273, %v1277
    %v1282 = vld [vmem:[%s8] sm:$0xff]
    %v1283 = vld [vmem:[%s8 + $0x8] sm:$0xff]
    %v1284 = vld [vmem:[%s8 + $0x10] sm:$0xff]
    %v1285 = vld [vmem:[%s8 + $0x18] sm:$0xff]
    %vm1286 = vcmask 130048
    %v1288 = vsel %vm1286, %v1282, 0
    %v1291 = vsel %vm1286, %v1283, 0
    %v1294 = vsel %vm1286, %v1284, 0
    %v1297 = vsel %vm1286, %v1285, 0
    %1299 = vmatprep.subr.mxu0 0.0
    %1300 = vmatpush1.msra.mxu0 0.0
    %1301 = vmatprep.subr.mxu0 0.0
    %1302 = vmatpush1.msra.mxu0 0.0
    %1303 = vmatprep.subr.mxu0 0.0
    %1304 = vmatpush1.msra.mxu0 0.0
    %1305 = vmatprep.subr.mxu0 0.0
    %1306 = vmatpush1.msra.mxu0 0.0
    %1307 = vmatprep.subr.mxu0 0.0
    %1308 = vmatpush1.msra.mxu0 0.0
    %1309 = vmatprep.subr.mxu0 0.0
    %1310 = vmatpush1.msra.mxu0 0.0
    %1311 = vmatprep.subr.mxu0 0.0
    %1312 = vmatpush1.msra.mxu0 0.0
    %1313 = vmatprep.subr.mxu0 0.0
    %1314 = vmatpush1.msra.mxu0 0.0
    %1315 = vmatprep.subr.mxu0 0.0
    %1316 = vmatpush1.msra.mxu0 0.0
    %1317 = vmatprep.subr.mxu0 0.0
    %1318 = vmatpush1.msra.mxu0 0.0
    %1319 = vmatprep.subr.mxu0 0.0
    %1320 = vmatpush1.msra.mxu0 0.0
    %1321 = vmatprep.subr.mxu0 0.0
    %1322 = vmatpush1.msra.mxu0 0.0
    %1323 = vmatprep.subr.mxu0 0.0
    %1324 = vmatpush1.msra.mxu0 0.0
    %1325 = vmatprep.subr.mxu0 0.0
    %1326 = vmatpush1.msra.mxu0 0.0
    %1327 = vmatprep.subr.mxu0 %v1273
    %1328 = vmatpush1.msra.mxu0 %v1272
    %1329 = vmatprep.subr.mxu0 %v1271
    %1330 = vmatpush1.msra.mxu0 %v1270
    %1331 = vmatprep.subr.mxu0 0.0
    %1332 = vmatpush2.msra.mxu0 0.0
    %1333 = vmatprep.subr.mxu0 0.0
    %1334 = vmatpush2.msra.mxu0 0.0
    %1335 = vmatprep.subr.mxu0 0.0
    %1336 = vmatpush2.msra.mxu0 0.0
    %1337 = vmatprep.subr.mxu0 0.0
    %1338 = vmatpush2.msra.mxu0 0.0
    %1339 = vmatprep.subr.mxu0 0.0
    %1340 = vmatpush2.msra.mxu0 0.0
    %1341 = vmatprep.subr.mxu0 0.0
    %1342 = vmatpush2.msra.mxu0 0.0
    %1343 = vmatprep.subr.mxu0 0.0
    %1344 = vmatpush2.msra.mxu0 0.0
    %1345 = vmatprep.subr.mxu0 0.0
    %1346 = vmatpush2.msra.mxu0 0.0
    %1347 = vmatprep.subr.mxu0 0.0
    %1348 = vmatpush2.msra.mxu0 0.0
    %1349 = vmatprep.subr.mxu0 0.0
    %1350 = vmatpush2.msra.mxu0 0.0
    %1351 = vmatprep.subr.mxu0 0.0
    %1352 = vmatpush2.msra.mxu0 0.0
    %1353 = vmatprep.subr.mxu0 0.0
    %1354 = vmatpush2.msra.mxu0 0.0
    %1355 = vmatprep.subr.mxu0 0.0
    %1356 = vmatpush2.msra.mxu0 0.0
    %1357 = vmatprep.subr.mxu0 0.0
    %1358 = vmatpush2.msra.mxu0 0.0
    %1359 = vmatprep.subr.mxu0 0.0
    %1360 = vmatpush2.msra.mxu0 0.0
    %1361 = vmatprep.subr.mxu0 0.0
    %1362 = vmatpush2.msra.mxu0 0.0
    %1363 = vmatprep.mubr.f32.mxu0 0.0
    %1364 = vmatmul.mubr.f32.gmra.mxu0 %v1288
    %v1365 = vpop.f32.mrf.mxu0
    %v1366 = vadd.f32 0.0, %v1365
    %v1367 = vpop.f32.mrf.mxu0
    %v1368 = vadd.f32 0.0, %v1367
    %1369 = vmatprep.mubr.f32.mxu0 0.0
    %1370 = vmatmul.mubr.f32.gmra.mxu0 %v1291
    %v1371 = vpop.f32.mrf.mxu0
    %v1372 = vadd.f32 0.0, %v1371
    %v1373 = vpop.f32.mrf.mxu0
    %v1374 = vadd.f32 0.0, %v1373
    %1375 = vmatprep.mubr.f32.mxu0 0.0
    %1376 = vmatmul.mubr.f32.gmra.mxu0 %v1294
    %v1377 = vpop.f32.mrf.mxu0
    %v1378 = vadd.f32 0.0, %v1377
    %v1379 = vpop.f32.mrf.mxu0
    %v1380 = vadd.f32 0.0, %v1379
    %1381 = vmatprep.mubr.f32.mxu0 0.0
    %1382 = vmatmul.mubr.f32.gmra.mxu0 %v1297
    %v1383 = vpop.f32.mrf.mxu0
    %v1384 = vadd.f32 0.0, %v1383
    %v1385 = vpop.f32.mrf.mxu0
    %v1386 = vadd.f32 0.0, %v1385
    %1387 = vdwg.mxu0
    %1388 = vmatprep.subr.mxu0 0.0
    %1389 = vmatpush1.msra.mxu0 0.0
    %1390 = vmatprep.subr.mxu0 0.0
    %1391 = vmatpush1.msra.mxu0 0.0
    %1392 = vmatprep.subr.mxu0 0.0
    %1393 = vmatpush1.msra.mxu0 0.0
    %1394 = vmatprep.subr.mxu0 0.0
    %1395 = vmatpush1.msra.mxu0 0.0
    %1396 = vmatprep.subr.mxu0 0.0
    %1397 = vmatpush1.msra.mxu0 0.0
    %1398 = vmatprep.subr.mxu0 0.0
    %1399 = vmatpush1.msra.mxu0 0.0
    %1400 = vmatprep.subr.mxu0 0.0
    %1401 = vmatpush1.msra.mxu0 0.0
    %1402 = vmatprep.subr.mxu0 0.0
    %1403 = vmatpush1.msra.mxu0 0.0
    %1404 = vmatprep.subr.mxu0 0.0
    %1405 = vmatpush1.msra.mxu0 0.0
    %1406 = vmatprep.subr.mxu0 0.0
    %1407 = vmatpush1.msra.mxu0 0.0
    %1408 = vmatprep.subr.mxu0 0.0
    %1409 = vmatpush1.msra.mxu0 0.0
    %1410 = vmatprep.subr.mxu0 0.0
    %1411 = vmatpush1.msra.mxu0 0.0
    %1412 = vmatprep.subr.mxu0 0.0
    %1413 = vmatpush1.msra.mxu0 0.0
    %1414 = vmatprep.subr.mxu0 0.0
    %1415 = vmatpush1.msra.mxu0 0.0
    %1416 = vmatprep.subr.mxu0 %v1281
    %1417 = vmatpush1.msra.mxu0 %v1280
    %1418 = vmatprep.subr.mxu0 %v1279
    %1419 = vmatpush1.msra.mxu0 %v1278
    %1420 = vmatprep.subr.mxu0 0.0
    %1421 = vmatpush2.msra.mxu0 0.0
    %1422 = vmatprep.subr.mxu0 0.0
    %1423 = vmatpush2.msra.mxu0 0.0
    %1424 = vmatprep.subr.mxu0 0.0
    %1425 = vmatpush2.msra.mxu0 0.0
    %1426 = vmatprep.subr.mxu0 0.0
    %1427 = vmatpush2.msra.mxu0 0.0
    %1428 = vmatprep.subr.mxu0 0.0
    %1429 = vmatpush2.msra.mxu0 0.0
    %1430 = vmatprep.subr.mxu0 0.0
    %1431 = vmatpush2.msra.mxu0 0.0
    %1432 = vmatprep.subr.mxu0 0.0
    %1433 = vmatpush2.msra.mxu0 0.0
    %1434 = vmatprep.subr.mxu0 0.0
    %1435 = vmatpush2.msra.mxu0 0.0
    %1436 = vmatprep.subr.mxu0 0.0
    %1437 = vmatpush2.msra.mxu0 0.0
    %1438 = vmatprep.subr.mxu0 0.0
    %1439 = vmatpush2.msra.mxu0 0.0
    %1440 = vmatprep.subr.mxu0 0.0
    %1441 = vmatpush2.msra.mxu0 0.0
    %1442 = vmatprep.subr.mxu0 0.0
    %1443 = vmatpush2.msra.mxu0 0.0
    %1444 = vmatprep.subr.mxu0 0.0
    %1445 = vmatpush2.msra.mxu0 0.0
    %1446 = vmatprep.subr.mxu0 0.0
    %1447 = vmatpush2.msra.mxu0 0.0
    %1448 = vmatprep.subr.mxu0 0.0
    %1449 = vmatpush2.msra.mxu0 0.0
    %1450 = vmatprep.subr.mxu0 0.0
    %1451 = vmatpush2.msra.mxu0 0.0
    %1452 = vmatprep.mubr.f32.mxu0 0.0
    %1453 = vmatmul.mubr.f32.gmra.mxu0 %v1288
    %v1454 = vpop.f32.mrf.mxu0
    %v1455 = vadd.f32 0.0, %v1454
    %v1456 = vpop.f32.mrf.mxu0
    %v1457 = vadd.f32 0.0, %v1456
    %1458 = vmatprep.mubr.f32.mxu0 0.0
    %1459 = vmatmul.mubr.f32.gmra.mxu0 %v1291
    %v1460 = vpop.f32.mrf.mxu0
    %v1461 = vadd.f32 0.0, %v1460
    %v1462 = vpop.f32.mrf.mxu0
    %v1463 = vadd.f32 0.0, %v1462
    %1464 = vmatprep.mubr.f32.mxu0 0.0
    %1465 = vmatmul.mubr.f32.gmra.mxu0 %v1294
    %v1466 = vpop.f32.mrf.mxu0
    %v1467 = vadd.f32 0.0, %v1466
    %v1468 = vpop.f32.mrf.mxu0
    %v1469 = vadd.f32 0.0, %v1468
    %1470 = vmatprep.mubr.f32.mxu0 0.0
    %1471 = vmatmul.mubr.f32.gmra.mxu0 %v1297
    %v1472 = vpop.f32.mrf.mxu0
    %v1473 = vadd.f32 0.0, %v1472
    %v1474 = vpop.f32.mrf.mxu0
    %v1475 = vadd.f32 0.0, %v1474
    %1476 = vdwg.mxu0
    %v1477 = vsub.f32 %v669, %v1366
    %v1478 = vsub.f32 %v670, %v1368
    %v1479 = vsub.f32 %v671, %v1372
    %v1480 = vsub.f32 %v672, %v1374
    %v1481 = vsub.f32 %v673, %v1378
    %v1482 = vsub.f32 %v674, %v1380
    %v1483 = vsub.f32 %v675, %v1384
    %v1484 = vsub.f32 %v676, %v1386
    %v1485 = vmul.f32 %v1477, %v1477
    %v1486 = vmul.f32 %v1478, %v1478
    %v1487 = vmul.f32 %v1479, %v1479
    %v1488 = vmul.f32 %v1480, %v1480
    %v1489 = vmul.f32 %v1481, %v1481
    %v1490 = vmul.f32 %v1482, %v1482
    %v1491 = vmul.f32 %v1483, %v1483
    %v1492 = vmul.f32 %v1484, %v1484
    %v1493 = vadd.f32 %v1485, %v1487
    %v1494 = vadd.f32 %v1493, %v1489
    %v1495 = vadd.f32 %v1494, %v1491
    %v1496 = vrot.slane %v1495, 4
    %v1497 = vadd.f32 %v1495, %v1496
    %v1498 = vrot.slane %v1497, 2
    %v1499 = vadd.f32 %v1497, %v1498
    %v1500 = vrot.slane %v1499, 1
    %v1501 = vadd.f32 %v1499, %v1500
    %v1502 = vadd.f32 %v1486, %v1488
    %v1503 = vadd.f32 %v1502, %v1490
    %v1504 = vadd.f32 %v1503, %v1492
    %v1505 = vrot.slane %v1504, 4
    %v1506 = vadd.f32 %v1504, %v1505
    %v1507 = vrot.slane %v1506, 2
    %v1508 = vadd.f32 %v1506, %v1507
    %v1509 = vrot.slane %v1508, 1
    %v1510 = vadd.f32 %v1508, %v1509
    %v1511 = vld [vmem:[%s10] sm:$0xff]
    %v1512 = vld [vmem:[%s10 + $0x8] sm:$0xff]
    %v1513 = vld [vmem:[%s10 + $0x10] sm:$0xff]
    %v1514 = vld [vmem:[%s10 + $0x18] sm:$0xff]
    %v1516 = vsel %vm1286, %v1511, 0
    %v1519 = vsel %vm1286, %v1512, 0
    %v1522 = vsel %vm1286, %v1513, 0
    %v1525 = vsel %vm1286, %v1514, 0
    %1527 = vmatprep.subr.mxu0 0.0
    %1528 = vmatpush1.msra.mxu0 0.0
    %1529 = vmatprep.subr.mxu0 0.0
    %1530 = vmatpush1.msra.mxu0 0.0
    %1531 = vmatprep.subr.mxu0 0.0
    %1532 = vmatpush1.msra.mxu0 0.0
    %1533 = vmatprep.subr.mxu0 0.0
    %1534 = vmatpush1.msra.mxu0 0.0
    %1535 = vmatprep.subr.mxu0 0.0
    %1536 = vmatpush1.msra.mxu0 0.0
    %1537 = vmatprep.subr.mxu0 0.0
    %1538 = vmatpush1.msra.mxu0 0.0
    %1539 = vmatprep.subr.mxu0 0.0
    %1540 = vmatpush1.msra.mxu0 0.0
    %1541 = vmatprep.subr.mxu0 0.0
    %1542 = vmatpush1.msra.mxu0 0.0
    %1543 = vmatprep.subr.mxu0 0.0
    %1544 = vmatpush1.msra.mxu0 0.0
    %1545 = vmatprep.subr.mxu0 0.0
    %1546 = vmatpush1.msra.mxu0 0.0
    %1547 = vmatprep.subr.mxu0 0.0
    %1548 = vmatpush1.msra.mxu0 0.0
    %1549 = vmatprep.subr.mxu0 0.0
    %1550 = vmatpush1.msra.mxu0 0.0
    %1551 = vmatprep.subr.mxu0 0.0
    %1552 = vmatpush1.msra.mxu0 0.0
    %1553 = vmatprep.subr.mxu0 0.0
    %1554 = vmatpush1.msra.mxu0 0.0
    %1555 = vmatprep.subr.mxu0 %v1281
    %1556 = vmatpush1.msra.mxu0 %v1280
    %1557 = vmatprep.subr.mxu0 %v1279
    %1558 = vmatpush1.msra.mxu0 %v1278
    %1559 = vmatprep.subr.mxu0 0.0
    %1560 = vmatpush2.msra.mxu0 0.0
    %1561 = vmatprep.subr.mxu0 0.0
    %1562 = vmatpush2.msra.mxu0 0.0
    %1563 = vmatprep.subr.mxu0 0.0
    %1564 = vmatpush2.msra.mxu0 0.0
    %1565 = vmatprep.subr.mxu0 0.0
    %1566 = vmatpush2.msra.mxu0 0.0
    %1567 = vmatprep.subr.mxu0 0.0
    %1568 = vmatpush2.msra.mxu0 0.0
    %1569 = vmatprep.subr.mxu0 0.0
    %1570 = vmatpush2.msra.mxu0 0.0
    %1571 = vmatprep.subr.mxu0 0.0
    %1572 = vmatpush2.msra.mxu0 0.0
    %1573 = vmatprep.subr.mxu0 0.0
    %1574 = vmatpush2.msra.mxu0 0.0
    %1575 = vmatprep.subr.mxu0 0.0
    %1576 = vmatpush2.msra.mxu0 0.0
    %1577 = vmatprep.subr.mxu0 0.0
    %1578 = vmatpush2.msra.mxu0 0.0
    %1579 = vmatprep.subr.mxu0 0.0
    %1580 = vmatpush2.msra.mxu0 0.0
    %1581 = vmatprep.subr.mxu0 0.0
    %1582 = vmatpush2.msra.mxu0 0.0
    %1583 = vmatprep.subr.mxu0 0.0
    %1584 = vmatpush2.msra.mxu0 0.0
    %1585 = vmatprep.subr.mxu0 0.0
    %1586 = vmatpush2.msra.mxu0 0.0
    %1587 = vmatprep.subr.mxu0 0.0
    %1588 = vmatpush2.msra.mxu0 0.0
    %1589 = vmatprep.subr.mxu0 0.0
    %1590 = vmatpush2.msra.mxu0 0.0
    %1591 = vmatprep.mubr.f32.mxu0 0.0
    %1592 = vmatmul.mubr.f32.gmra.mxu0 %v1516
    %v1593 = vpop.f32.mrf.mxu0
    %v1594 = vadd.f32 0.0, %v1593
    %v1595 = vpop.f32.mrf.mxu0
    %v1596 = vadd.f32 0.0, %v1595
    %1597 = vmatprep.mubr.f32.mxu0 0.0
    %1598 = vmatmul.mubr.f32.gmra.mxu0 %v1519
    %v1599 = vpop.f32.mrf.mxu0
    %v1600 = vadd.f32 0.0, %v1599
    %v1601 = vpop.f32.mrf.mxu0
    %v1602 = vadd.f32 0.0, %v1601
    %1603 = vmatprep.mubr.f32.mxu0 0.0
    %1604 = vmatmul.mubr.f32.gmra.mxu0 %v1522
    %v1605 = vpop.f32.mrf.mxu0
    %v1606 = vadd.f32 0.0, %v1605
    %v1607 = vpop.f32.mrf.mxu0
    %v1608 = vadd.f32 0.0, %v1607
    %1609 = vmatprep.mubr.f32.mxu0 0.0
    %1610 = vmatmul.mubr.f32.gmra.mxu0 %v1525
    %v1611 = vpop.f32.mrf.mxu0
    %v1612 = vadd.f32 0.0, %v1611
    %v1613 = vpop.f32.mrf.mxu0
    %v1614 = vadd.f32 0.0, %v1613
    %1615 = vdwg.mxu0
    %v1616 = vadd.f32 %v1594, %v1600
    %v1617 = vadd.f32 %v1616, %v1606
    %v1618 = vadd.f32 %v1617, %v1612
    %v1619 = vrot.slane %v1618, 4
    %v1620 = vadd.f32 %v1618, %v1619
    %v1621 = vrot.slane %v1620, 2
    %v1622 = vadd.f32 %v1620, %v1621
    %v1623 = vrot.slane %v1622, 1
    %v1624 = vadd.f32 %v1622, %v1623
    %v1625 = vadd.f32 %v1596, %v1602
    %v1626 = vadd.f32 %v1625, %v1608
    %v1627 = vadd.f32 %v1626, %v1614
    %v1628 = vrot.slane %v1627, 4
    %v1629 = vadd.f32 %v1627, %v1628
    %v1630 = vrot.slane %v1629, 2
    %v1631 = vadd.f32 %v1629, %v1630
    %v1632 = vrot.slane %v1631, 1
    %v1633 = vadd.f32 %v1631, %v1632
    %v1634 = vmul.f32 %v1455, %v1366
    %v1635 = vmul.f32 %v1457, %v1368
    %v1636 = vmul.f32 %v1461, %v1372
    %v1637 = vmul.f32 %v1463, %v1374
    %v1638 = vmul.f32 %v1467, %v1378
    %v1639 = vmul.f32 %v1469, %v1380
    %v1640 = vmul.f32 %v1473, %v1384
    %v1641 = vmul.f32 %v1475, %v1386
    %v1642 = vadd.f32 %v1634, %v1636
    %v1643 = vadd.f32 %v1642, %v1638
    %v1644 = vadd.f32 %v1643, %v1640
    %v1645 = vrot.slane %v1644, 4
    %v1646 = vadd.f32 %v1644, %v1645
    %v1647 = vrot.slane %v1646, 2
    %v1648 = vadd.f32 %v1646, %v1647
    %v1649 = vrot.slane %v1648, 1
    %v1650 = vadd.f32 %v1648, %v1649
    %v1651 = vadd.f32 %v1635, %v1637
    %v1652 = vadd.f32 %v1651, %v1639
    %v1653 = vadd.f32 %v1652, %v1641
    %v1654 = vrot.slane %v1653, 4
    %v1655 = vadd.f32 %v1653, %v1654
    %v1656 = vrot.slane %v1655, 2
    %v1657 = vadd.f32 %v1655, %v1656
    %v1658 = vrot.slane %v1657, 1
    %v1659 = vadd.f32 %v1657, %v1658
    %s1660 = sld [smem:[#allocation6 + $0x1]]
    %v1661 = vadd.f32 %v1501, %v1624
    %v1662 = vadd.f32 %v1510, %v1633
    %v1663 = vsub.f32 %v1661, %v1650
    %v1664 = vsub.f32 %v1662, %v1659
    %v1665 = vstv %s1660
    %v1666 = vmul.f32 %v1665, %v1663
    %v1667 = vmul.f32 %v1665, %v1664
    %v1668 = vadd.f32 %v1155, %v1666
    %v1669 = vadd.f32 %v1156, %v1667
    %v1672 = vcombine.low %v1668, %v1669
    %v1674 = vunpack.c.l.s4 1966171168
    %v1675 = vunpack.c.0.s8 %v1674
    %v1676 = vlaneseq
    %v1677 = vshrl.u32 %v1676, 7
    %v1678 = vsub.s32 %v1675, %v1677
    %v1679 = vrot.slane %v1672, %v1678
    %v1681 = vunpack.c.l.s4 1966171168
    %v1682 = vunpack.c.0.s8 %v1681
    %v1683 = vlaneseq
    %v1684 = vshrl.u32 %v1683, 7
    %v1685 = vsub.s32 %v1682, %v1684
    %v1686 = vrot.slane %v1679, %v1685
    %v1688 = vlaneseq
    %vm1689 = vcmp.ge.s32.totalorder %v1688, 0
    %vm1690 = vcmp.lt.s32.totalorder %v1688, 256
    %vm1691 = vmand %vm1689, %vm1690
    %1692 = vst.msk [vmem:[#allocation14] sm:$0x3] %vm1691, %v1686
    // Predicated region
    $region70: #{tpu_custom_call.1} parent=1 // pred_check
      _
    $region71: #{tpu_custom_call.1} parent=1 // pred_check_branch
      %1694 = sbr.rel (0) target = $region73
    $region72: #{tpu_custom_call.1} parent=1 // pred_region
      %s1696 = ssub.s32 32, 32
      %1697 = vsyncadd [#allocation4], %s1696
      %s1699 = sshll.u32 [#allocation14], 4
      %s1700 = int_to_ptr.vmem [resolvable:$true] %s1699
      %1702 = dma.vmem_to_hbm [thread:$0]  %s1700, 32, %s11, [#allocation4]
    $region73: #{tpu_custom_call.1} parent=1 // pred_fallthru
      _
    // Predicated region
    $region74: #{tpu_custom_call.1} parent=1 // pred_check
      _
    $region75: #{tpu_custom_call.1} parent=1 // pred_check_branch
      %1704 = sbr.rel (0) target = $region77
    $region76: #{tpu_custom_call.1} parent=1 // pred_region
      %s1706 = ssub.s32 512, 512
      %1707 = vsyncadd [#allocation16], %s1706
      %s1708 = sshll.u32 [#allocation15], 4
      %s1709 = int_to_ptr.vmem [resolvable:$true] %s1708
      %1714 = dma.vmem_to_hbm [thread:$0]  %s1709, 512, %s12, [#allocation16], 256, 256, 16
    $region77: #{tpu_custom_call.1} parent=1 // pred_fallthru
      _
    // Predicated region
    $region78: #{tpu_custom_call.1} parent=1 // pred_check
      _
    $region79: #{tpu_custom_call.1} parent=1 // pred_check_branch
      %1716 = sbr.rel (0) target = $region81
    $region80: #{tpu_custom_call.1} parent=1 // pred_region
      %1717 = dma.done [#allocation4], 32
    $region81: #{tpu_custom_call.1} parent=1 // pred_fallthru
      _
    // Predicated region
    $region82: #{tpu_custom_call.1} parent=1 // pred_check
      _
    $region83: #{tpu_custom_call.1} parent=1 // pred_check_branch
      %1719 = sbr.rel (0) target = $region85
    $region84: #{tpu_custom_call.1} parent=1 // pred_region
      %1720 = dma.done [#allocation16], 512
    $region85: #{tpu_custom_call.1} parent=1 // pred_fallthru
      _
    %1721 = vsyncpa [#allocation3], 1
    %1722 = vsyncpa [#allocation10], 1
    %1723 = vsyncpa [#allocation13], 1
    %1724 = vsyncpa [#allocation4], 1
    %1725 = vsyncpa [#allocation16], 1
    %1726 = vsyncpa [#allocation5], 1
    %1727 = vsyncpa [#allocation7], 1

</llo_original>
